<compile_context>
chip_gen: v5e
topology: v5e:2x2
jax: 0.10.0
libtpu: 0.0.40
codegen_flags: <defaults>
</compile_context>

<pallas_src>
import functools
import math

import jax
import jax.numpy as jnp
from jax.experimental import pallas as pl
from jax.experimental.pallas import tpu as pltpu


# ----------------------------- config (small) --------------------------------
BATCH = 2
SEQ = 8
HIDDEN = 32
NUM_HEADS = 2
HEAD_DIM = HIDDEN // NUM_HEADS
INTERMEDIATE = 64
NUM_LAYERS = 2
VOCAB = 50
MAX_POS = 16
TYPE_VOCAB = 2
LN_EPS = 1e-12
NEG_INF = -1e9

HP = 128   # lane-padded hidden width
IP = 128   # lane-padded FFN intermediate width


# ------------------------------ kernel helpers --------------------------------
def _gelu(x):
    # TODO(synk): HF BERT default 'gelu' is erf-based; tanh approximation used here.
    return 0.5 * x * (1.0 + jnp.tanh(0.7978845608028654 * (x + 0.044715 * x * x * x)))


def _ln_padded(x, g, b, inv_n, eps=LN_EPS):
    """LayerNorm over a zero-padded last dim; stats use only the real width.

    Padded lanes of x are zero, and gamma/beta are zero-padded, so padded
    output lanes stay exactly zero (invariant maintained across the network).
    """
    mu = jnp.sum(x, axis=-1, keepdims=True) * inv_n
    var = jnp.sum(x * x, axis=-1, keepdims=True) * inv_n - mu * mu
    var = jnp.maximum(var, 0.0)
    return (x - mu) * jax.lax.rsqrt(var + eps) * g + b


# ------------------------------ fused BERT kernel ------------------------------
def bert_fused_kernel(emb_ref, mask_ref, eg_ref, eb_ref,
                      wq_ref, bq_ref, wk_ref, bk_ref, wv_ref, bv_ref,
                      wo_ref, bo_ref, l1g_ref, l1b_ref,
                      w1_ref, b1_ref, w2_ref, b2_ref, l2g_ref, l2b_ref,
                      hw_ref, hb_ref, out_ref, x_scr,
                      *, b_blk, seq, nh, hd, h_real):
    hp = emb_ref.shape[-1]
    n = b_blk * seq          # rows in the flattened activation
    g = b_blk * nh           # folded (batch, head) groups
    inv_h = 1.0 / h_real
    layer = pl.program_id(1)

    # ---- layer 0: embedding LayerNorm into the VMEM-resident activation ----
    @pl.when(layer == 0)
    def _init():
        emb = emb_ref[...].reshape(n, hp)
        x_scr[...] = _ln_padded(emb, eg_ref[...], eb_ref[...],
                                inv_h).reshape(b_blk, seq, hp)

    x3 = x_scr[...]                          # (b_blk, seq, hp)
    xf = x3.reshape(n, hp)

    def per_group(w):                        # (nh, ...) -> (b_blk*nh, ...)
        return jnp.broadcast_to(w[None], (b_blk,) + w.shape).reshape((g,) + w.shape[1:])

    # ---- self-attention (heads batched via a folded group axis) ----
    xg = jnp.broadcast_to(x3[:, None], (b_blk, nh, seq, hp)).reshape(g, seq, hp)

    wq = per_group(wq_ref[0]); bq = per_group(bq_ref[0][:, None, :])
    wk = per_group(wk_ref[0]); bk = per_group(bk_ref[0][:, None, :])
    wv = per_group(wv_ref[0]); bv = per_group(bv_ref[0][:, None, :])

    q = jnp.einsum('gsp,gpd->gsd', xg, wq, preferred_element_type=jnp.float32) + bq
    k = jnp.einsum('gsp,gpd->gsd', xg, wk, preferred_element_type=jnp.float32) + bk
    v = jnp.einsum('gsp,gpd->gsd', xg, wv, preferred_element_type=jnp.float32) + bv

    scale = 1.0 / math.sqrt(hd)
    s = jnp.einsum('gsd,gtd->gst', q, k, preferred_element_type=jnp.float32) * scale
    s = s + mask_ref[...]                    # (g, 1, seq) additive mask
    s = s - jnp.max(s, axis=-1, keepdims=True)
    p = jnp.exp(s)
    p = p * pl.reciprocal(jnp.sum(p, axis=-1, keepdims=True), approx=True)
    ctx = jnp.einsum('gst,gtd->gsd', p, v, preferred_element_type=jnp.float32)

    # Output projection: sum per-head partial projections (no lane concat).
    wo = per_group(wo_ref[0])                # (g, hd, hp)
    attn_g = jnp.einsum('gsd,gdp->gsp', ctx, wo, preferred_element_type=jnp.float32)
    attn = jnp.sum(attn_g.reshape(b_blk, nh, seq, hp), axis=1) + bo_ref[0]
    attn = attn.reshape(n, hp)

    x1 = _ln_padded(xf + attn, l1g_ref[0], l1b_ref[0], inv_h)

    # ---- FFN ----
    h1 = _gelu(jnp.dot(x1, w1_ref[0], preferred_element_type=jnp.float32) + b1_ref[0])
    ffn = jnp.dot(h1, w2_ref[0], preferred_element_type=jnp.float32) + b2_ref[0]
    x2 = _ln_padded(x1 + ffn, l2g_ref[0], l2b_ref[0], inv_h)
    x_scr[...] = x2.reshape(b_blk, seq, hp)

    # ---- last layer: [CLS] linear head, lane-dense 128-wide output store ----
    @pl.when(layer == pl.num_programs(1) - 1)
    def _head():
        cls = x2.reshape(b_blk, seq, hp)[:, 0, :]            # (b_blk, hp)
        out_ref[0] = (jnp.dot(cls, hw_ref[...], preferred_element_type=jnp.float32)
                      + hb_ref[...])


# ------------------------------- pallas wrapper --------------------------------
def _fused_call(kp, emb, mask_g, b_blk):
    b_total, seq, hp = emb.shape
    nb = b_total // b_blk
    lp = kp['layers']
    num_layers, nh, _, hd = lp['wq'].shape
    ip = lp['w1'].shape[2]

    kernel = functools.partial(bert_fused_kernel, b_blk=b_blk, seq=seq,
                               nh=nh, hd=hd, h_real=HIDDEN)

    def batch_spec(shape):
        nrest = len(shape) - 1
        return pl.BlockSpec(shape, lambda bi, l: (bi,) + (0,) * nrest)

    def const_spec(shape):
        ndim = len(shape)
        return pl.BlockSpec(shape, lambda bi, l: (0,) * ndim)

    def layer_spec(shape):       # `shape` excludes the leading layer dim
        nrest = len(shape)
        return pl.BlockSpec((1,) + shape, lambda bi, l: (l,) + (0,) * nrest)

    in_specs = [
        batch_spec((b_blk, seq, hp)),               # embeddings
        batch_spec((b_blk * nh, 1, seq)),           # additive attention mask
        const_spec((1, hp)), const_spec((1, hp)),   # embedding LN gamma/beta
        layer_spec((nh, hp, hd)), layer_spec((nh, hd)),   # Wq, bq
        layer_spec((nh, hp, hd)), layer_spec((nh, hd)),   # Wk, bk
        layer_spec((nh, hp, hd)), layer_spec((nh, hd)),   # Wv, bv
        layer_spec((nh, hd, hp)), layer_spec((1, hp)),    # Wo, bo
        layer_spec((1, hp)), layer_spec((1, hp)),         # ln1 gamma/beta
        layer_spec((hp, ip)), layer_spec((1, ip)),        # W1, b1
        layer_spec((ip, hp)), layer_spec((1, hp)),        # W2, b2
        layer_spec((1, hp)), layer_spec((1, hp)),         # ln2 gamma/beta
        const_spec((hp, hp)), const_spec((1, hp)),        # head W, b
    ]

    out = pl.pallas_call(
        kernel,
        out_shape=jax.ShapeDtypeStruct((nb, b_blk, hp), jnp.float32),
        grid=(nb, num_layers),
        in_specs=in_specs,
        out_specs=pl.BlockSpec((1, b_blk, hp), lambda bi, l: (bi, 0, 0)),
        scratch_shapes=[pltpu.VMEM((b_blk, seq, hp), jnp.float32)],
        compiler_params=pltpu.CompilerParams(
            dimension_semantics=("parallel", "arbitrary")),
    )(emb, mask_g,
      kp['emb_ln_g'], kp['emb_ln_b'],
      lp['wq'], lp['bq'], lp['wk'], lp['bk'], lp['wv'], lp['bv'],
      lp['wo'], lp['bo'], lp['ln1_g'], lp['ln1_b'],
      lp['w1'], lp['b1'], lp['w2'], lp['b2'], lp['ln2_g'], lp['ln2_b'],
      kp['head_w'], kp['head_b'])
    return out.reshape(b_total, hp)[:, :HIDDEN]


def bert_cls_forward(kp, input_ids, attention_mask):
    b, s = input_ids.shape
    # Embedding gathers kept in plain JAX (glue); tables are lane-padded.
    word = jnp.take(kp['word_emb'], input_ids, axis=0)            # (B,S,HP)
    emb = word + kp['pos_emb'][:s][None] + kp['type_emb'][0][None, None, :]
    add_mask = (1.0 - attention_mask.astype(jnp.float32)) * NEG_INF   # (B,S)
    mask_g = jnp.repeat(add_mask, NUM_HEADS, axis=0)[:, None, :]      # (B*nh,1,S)
    b_blk = 2 if b % 2 == 0 else 1
    return _fused_call(kp, emb, mask_g, b_blk)


def bert_model_forward(kp, input_ids, attention_mask,
                       pos_input_ids=None, pos_attention_mask=None):
    if pos_input_ids is None:
        return bert_cls_forward(kp, input_ids, attention_mask)
    # Fold origin + pos into one batch -> a single fused encode pass.
    ids = jnp.concatenate([input_ids, pos_input_ids], axis=0)
    msk = jnp.concatenate([attention_mask, pos_attention_mask], axis=0)
    out = bert_cls_forward(kp, ids, msk)
    b = input_ids.shape[0]
    return out[:b], out[b:]


# ------------------------------ parameter setup -------------------------------
def init_raw_params(key):
    std = 0.02
    ks = iter(jax.random.split(key, 8 + NUM_LAYERS * 16))
    nrm = lambda shape: (std * jax.random.normal(next(ks), shape)).astype(jnp.float32)
    raw = {
        'word_emb': nrm((VOCAB, HIDDEN)),
        'pos_emb': nrm((MAX_POS, HIDDEN)),
        'type_emb': nrm((TYPE_VOCAB, HIDDEN)),
        'emb_ln_g': jnp.ones((1, HIDDEN), jnp.float32),
        'emb_ln_b': jnp.zeros((1, HIDDEN), jnp.float32),
        'head_w': nrm((HIDDEN, HIDDEN)),
        'head_b': jnp.zeros((1, HIDDEN), jnp.float32),
        'layers': [],
    }
    for _ in range(NUM_LAYERS):
        raw['layers'].append({
            'wq': nrm((HIDDEN, HIDDEN)), 'bq': jnp.zeros((1, HIDDEN), jnp.float32),
            'wk': nrm((HIDDEN, HIDDEN)), 'bk': jnp.zeros((1, HIDDEN), jnp.float32),
            'wv': nrm((HIDDEN, HIDDEN)), 'bv': jnp.zeros((1, HIDDEN), jnp.float32),
            'wo': nrm((HIDDEN, HIDDEN)), 'bo': jnp.zeros((1, HIDDEN), jnp.float32),
            'ln1_g': jnp.ones((1, HIDDEN), jnp.float32),
            'ln1_b': jnp.zeros((1, HIDDEN), jnp.float32),
            'w1': nrm((HIDDEN, INTERMEDIATE)),
            'b1': jnp.zeros((1, INTERMEDIATE), jnp.float32),
            'w2': nrm((INTERMEDIATE, HIDDEN)),
            'b2': jnp.zeros((1, HIDDEN), jnp.float32),
            'ln2_g': jnp.ones((1, HIDDEN), jnp.float32),
            'ln2_b': jnp.zeros((1, HIDDEN), jnp.float32),
        })
    return raw


def _pad_to(a, shape):
    return jnp.pad(a, [(0, t - s) for s, t in zip(a.shape, shape)])


def build_kernel_params(raw):
    """Zero-pad to lane-dense widths, split heads, and stack per-layer weights."""
    kp = {
        'word_emb': _pad_to(raw['word_emb'], (VOCAB, HP)),
        'pos_emb': _pad_to(raw['pos_emb'], (MAX_POS, HP)),
        'type_emb': _pad_to(raw['type_emb'], (TYPE_VOCAB, HP)),
        'emb_ln_g': _pad_to(raw['emb_ln_g'], (1, HP)),
        'emb_ln_b': _pad_to(raw['emb_ln_b'], (1, HP)),
        'head_w': _pad_to(raw['head_w'], (HP, HP)),
        'head_b': _pad_to(raw['head_b'], (1, HP)),
    }
    names = ('wq', 'bq', 'wk', 'bk', 'wv', 'bv', 'wo', 'bo',
             'ln1_g', 'ln1_b', 'w1', 'b1', 'w2', 'b2', 'ln2_g', 'ln2_b')
    stk = {k: [] for k in names}

    def head_in(w):   # (H, H) -> (nh, HP, hd): per-head input projection
        return _pad_to(w.reshape(HIDDEN, NUM_HEADS, HEAD_DIM).transpose(1, 0, 2),
                       (NUM_HEADS, HP, HEAD_DIM))

    for lp in raw['layers']:
        stk['wq'].append(head_in(lp['wq']))
        stk['wk'].append(head_in(lp['wk']))
        stk['wv'].append(head_in(lp['wv']))
        stk['bq'].append(lp['bq'].reshape(NUM_HEADS, HEAD_DIM))
        stk['bk'].append(lp['bk'].reshape(NUM_HEADS, HEAD_DIM))
        stk['bv'].append(lp['bv'].reshape(NUM_HEADS, HEAD_DIM))
        stk['wo'].append(_pad_to(lp['wo'].reshape(NUM_HEADS, HEAD_DIM, HIDDEN),
                                 (NUM_HEADS, HEAD_DIM, HP)))
        stk['bo'].append(_pad_to(lp['bo'], (1, HP)))
        stk['ln1_g'].append(_pad_to(lp['ln1_g'], (1, HP)))
        stk['ln1_b'].append(_pad_to(lp['ln1_b'], (1, HP)))
        stk['w1'].append(_pad_to(lp['w1'], (HP, IP)))
        stk['b1'].append(_pad_to(lp['b1'], (1, IP)))
        stk['w2'].append(_pad_to(lp['w2'], (IP, HP)))
        stk['b2'].append(_pad_to(lp['b2'], (1, HP)))
        stk['ln2_g'].append(_pad_to(lp['ln2_g'], (1, HP)))
        stk['ln2_b'].append(_pad_to(lp['ln2_b'], (1, HP)))
    kp['layers'] = {k: jnp.stack(v, axis=0) for k, v in stk.items()}
    return kp


# --------------------------- pure-JAX reference (check) ------------------------
def _ref_ln(x, g, b):
    mu = jnp.mean(x, axis=-1, keepdims=True)
    var = jnp.mean((x - mu) ** 2, axis=-1, keepdims=True)
    return (x - mu) * jax.lax.rsqrt(var + LN_EPS) * g + b


def ref_forward(raw, input_ids, attention_mask):
    b, s = input_ids.shape
    x = (raw['word_emb'][input_ids] + raw['pos_emb'][:s][None]
         + raw['type_emb'][0][None, None, :])
    x = _ref_ln(x, raw['emb_ln_g'], raw['emb_ln_b'])
    am = ((1.0 - attention_mask.astype(jnp.float32)) * NEG_INF)[:, None, None, :]
    scale = 1.0 / math.sqrt(HEAD_DIM)
    for lp in raw['layers']:
        def split(t):
            return t.reshape(b, s, NUM_HEADS, HEAD_DIM).transpose(0, 2, 1, 3)
        q = split(x @ lp['wq'] + lp['bq'])
        k = split(x @ lp['wk'] + lp['bk'])
        v = split(x @ lp['wv'] + lp['bv'])
        sc = jnp.einsum('bhsd,bhtd->bhst', q, k) * scale + am
        p = jax.nn.softmax(sc, axis=-1)
        ctx = jnp.einsum('bhst,bhtd->bhsd', p, v).transpose(0, 2, 1, 3).reshape(b, s, HIDDEN)
        x = _ref_ln(x + ctx @ lp['wo'] + lp['bo'], lp['ln1_g'], lp['ln1_b'])
        h1 = _gelu(x @ lp['w1'] + lp['b1'])
        x = _ref_ln(x + h1 @ lp['w2'] + lp['b2'], lp['ln2_g'], lp['ln2_b'])
    return x[:, 0, :] @ raw['head_w'] + raw['head_b']


# ----------------------------------- main --------------------------------------
if __name__ == "__main__":
    key = jax.random.PRNGKey(0)
    pkey, ikey, pikey = jax.random.split(key, 3)
    raw = init_raw_params(pkey)
    kparams = build_kernel_params(raw)

    input_ids = jax.random.randint(ikey, (BATCH, SEQ), 0, VOCAB, dtype=jnp.int32)
    attention_mask = jnp.ones((BATCH, SEQ), jnp.int32).at[1, SEQ - 2:].set(0)
    pos_input_ids = jax.random.randint(pikey, (BATCH, SEQ), 0, VOCAB, dtype=jnp.int32)
    pos_attention_mask = jnp.ones((BATCH, SEQ), jnp.int32)

    forward = jax.jit(bert_model_forward)
    origin_out, pos_out = forward(kparams, input_ids, attention_mask,
                                  pos_input_ids, pos_attention_mask)
    jax.block_until_ready((origin_out, pos_out))

    # Correctness vs. an unpadded pure-JAX reference of the same model.
    ref_origin = ref_forward(raw, input_ids, attention_mask)
    ref_pos = ref_forward(raw, pos_input_ids, pos_attention_mask)

    assert origin_out.shape == (BATCH, HIDDEN) and pos_out.shape == (BATCH, HIDDEN)
    assert bool(jnp.all(jnp.isfinite(origin_out))) and bool(jnp.all(jnp.isfinite(pos_out)))
    assert bool(jnp.allclose(origin_out, ref_origin, atol=1e-2, rtol=1e-2))
    assert bool(jnp.allclose(pos_out, ref_pos, atol=1e-2, rtol=1e-2))
    print("KERNEL_OK")
</pallas_src>

<mosaic_0001>
module attributes {stable_mosaic.version = 11 : i64} {
  func.func @bert_fused_kernel(%arg0: i32, %arg1: i32, %arg2: memref<2x8x128xf32, #tpu.memory_space<vmem>>, %arg3: memref<4x1x8xf32, #tpu.memory_space<vmem>>, %arg4: memref<1x128xf32, #tpu.memory_space<vmem>>, %arg5: memref<1x128xf32, #tpu.memory_space<vmem>>, %arg6: memref<1x2x128x16xf32, #tpu.memory_space<vmem>>, %arg7: memref<1x2x16xf32, #tpu.memory_space<vmem>>, %arg8: memref<1x2x128x16xf32, #tpu.memory_space<vmem>>, %arg9: memref<1x2x16xf32, #tpu.memory_space<vmem>>, %arg10: memref<1x2x128x16xf32, #tpu.memory_space<vmem>>, %arg11: memref<1x2x16xf32, #tpu.memory_space<vmem>>, %arg12: memref<1x2x16x128xf32, #tpu.memory_space<vmem>>, %arg13: memref<1x1x128xf32, #tpu.memory_space<vmem>>, %arg14: memref<1x1x128xf32, #tpu.memory_space<vmem>>, %arg15: memref<1x1x128xf32, #tpu.memory_space<vmem>>, %arg16: memref<1x128x128xf32, #tpu.memory_space<vmem>>, %arg17: memref<1x1x128xf32, #tpu.memory_space<vmem>>, %arg18: memref<1x128x128xf32, #tpu.memory_space<vmem>>, %arg19: memref<1x1x128xf32, #tpu.memory_space<vmem>>, %arg20: memref<1x1x128xf32, #tpu.memory_space<vmem>>, %arg21: memref<1x1x128xf32, #tpu.memory_space<vmem>>, %arg22: memref<128x128xf32, #tpu.memory_space<vmem>>, %arg23: memref<1x128xf32, #tpu.memory_space<vmem>>, %arg24: memref<1x2x128xf32, #tpu.memory_space<vmem>>, %arg25: memref<2x8x128xf32, #tpu.memory_space<vmem>>) attributes {dimension_semantics = [#tpu.dimension_semantics<parallel>, #tpu.dimension_semantics<arbitrary>], iteration_bounds = array<i64: 2, 2>, scalar_prefetch = 0 : i64, scratch_operands = 1 : i64, tpu.core_type = #tpu.core_type<tc>, window_params = [{transform_indices = @transform_0, window_bounds = array<i64: 2, 8, 128>}, {transform_indices = @transform_1, window_bounds = array<i64: 4, 1, 8>}, {pipeline_mode = #tpu.pipeline_mode<synchronous>, transform_indices = @transform_2, window_bounds = array<i64: 1, 128>}, {pipeline_mode = #tpu.pipeline_mode<synchronous>, transform_indices = @transform_3, window_bounds = array<i64: 1, 128>}, {transform_indices = @transform_4, window_bounds = array<i64: 1, 2, 128, 16>}, {transform_indices = @transform_5, window_bounds = array<i64: 1, 2, 16>}, {transform_indices = @transform_6, window_bounds = array<i64: 1, 2, 128, 16>}, {transform_indices = @transform_7, window_bounds = array<i64: 1, 2, 16>}, {transform_indices = @transform_8, window_bounds = array<i64: 1, 2, 128, 16>}, {transform_indices = @transform_9, window_bounds = array<i64: 1, 2, 16>}, {transform_indices = @transform_10, window_bounds = array<i64: 1, 2, 16, 128>}, {transform_indices = @transform_11, window_bounds = array<i64: 1, 1, 128>}, {transform_indices = @transform_12, window_bounds = array<i64: 1, 1, 128>}, {transform_indices = @transform_13, window_bounds = array<i64: 1, 1, 128>}, {transform_indices = @transform_14, window_bounds = array<i64: 1, 128, 128>}, {transform_indices = @transform_15, window_bounds = array<i64: 1, 1, 128>}, {transform_indices = @transform_16, window_bounds = array<i64: 1, 128, 128>}, {transform_indices = @transform_17, window_bounds = array<i64: 1, 1, 128>}, {transform_indices = @transform_18, window_bounds = array<i64: 1, 1, 128>}, {transform_indices = @transform_19, window_bounds = array<i64: 1, 1, 128>}, {pipeline_mode = #tpu.pipeline_mode<synchronous>, transform_indices = @transform_20, window_bounds = array<i64: 128, 128>}, {pipeline_mode = #tpu.pipeline_mode<synchronous>, transform_indices = @transform_21, window_bounds = array<i64: 1, 128>}, {transform_indices = @transform_22, window_bounds = array<i64: 1, 2, 128>}]} {
    %c0_i32 = arith.constant 0 : i32
    %0 = arith.cmpi eq, %arg1, %c0_i32 : i32
    %1 = arith.extui %0 : i1 to i32
    %c0_i32_0 = arith.constant 0 : i32
    %2 = arith.cmpi ne, %1, %c0_i32_0 : i32
    scf.if %2 {
      %c0_89 = arith.constant 0 : index
      %c0_90 = arith.constant 0 : index
      %c0_91 = arith.constant 0 : index
      %179 = vector.load %arg2[%c0_89, %c0_90, %c0_91] : memref<2x8x128xf32, #tpu.memory_space<vmem>>, vector<2x8x128xf32>
      %180 = vector.shape_cast %179 : vector<2x8x128xf32> to vector<16x128xf32>
      %c0_92 = arith.constant 0 : index
      %c0_93 = arith.constant 0 : index
      %181 = vector.load %arg4[%c0_92, %c0_93] : memref<1x128xf32, #tpu.memory_space<vmem>>, vector<1x128xf32>
      %c0_94 = arith.constant 0 : index
      %c0_95 = arith.constant 0 : index
      %182 = vector.load %arg5[%c0_94, %c0_95] : memref<1x128xf32, #tpu.memory_space<vmem>>, vector<1x128xf32>
      %cst_96 = arith.constant dense<0.000000e+00> : vector<16xf32>
      %183 = vector.multi_reduction <add>, %180, %cst_96 [1] : vector<16x128xf32> to vector<16xf32>
      %184 = vector.shape_cast %183 : vector<16xf32> to vector<16x1xf32>
      %cst_97 = arith.constant 3.125000e-02 : f32
      %185 = vector.broadcast %cst_97 : f32 to vector<16x1xf32>
      %186 = arith.mulf %184, %185 : vector<16x1xf32>
      %187 = arith.mulf %180, %180 : vector<16x128xf32>
      %cst_98 = arith.constant dense<0.000000e+00> : vector<16xf32>
      %188 = vector.multi_reduction <add>, %187, %cst_98 [1] : vector<16x128xf32> to vector<16xf32>
      %189 = vector.shape_cast %188 : vector<16xf32> to vector<16x1xf32>
      %cst_99 = arith.constant 3.125000e-02 : f32
      %190 = vector.broadcast %cst_99 : f32 to vector<16x1xf32>
      %191 = arith.mulf %189, %190 : vector<16x1xf32>
      %192 = arith.mulf %186, %186 : vector<16x1xf32>
      %193 = arith.subf %191, %192 : vector<16x1xf32>
      %cst_100 = arith.constant 0.000000e+00 : f32
      %194 = vector.broadcast %cst_100 : f32 to vector<16x1xf32>
      %195 = arith.maximumf %193, %194 : vector<16x1xf32>
      %196 = vector.broadcast %186 : vector<16x1xf32> to vector<16x128xf32>
      %197 = arith.subf %180, %196 : vector<16x128xf32>
      %cst_101 = arith.constant 9.99999996E-13 : f32
      %198 = vector.broadcast %cst_101 : f32 to vector<16x1xf32>
      %199 = arith.addf %195, %198 : vector<16x1xf32>
      %200 = math.rsqrt %199 : vector<16x1xf32>
      %201 = vector.broadcast %200 : vector<16x1xf32> to vector<16x128xf32>
      %202 = arith.mulf %197, %201 : vector<16x128xf32>
      %203 = vector.broadcast %181 : vector<1x128xf32> to vector<16x128xf32>
      %204 = arith.mulf %202, %203 : vector<16x128xf32>
      %205 = vector.broadcast %182 : vector<1x128xf32> to vector<16x128xf32>
      %206 = arith.addf %204, %205 : vector<16x128xf32>
      %207 = vector.shape_cast %206 : vector<16x128xf32> to vector<2x8x128xf32>
      %c0_102 = arith.constant 0 : index
      %c0_103 = arith.constant 0 : index
      %c0_104 = arith.constant 0 : index
      %208 = vector.load %arg25[%c0_102, %c0_103, %c0_104] : memref<2x8x128xf32, #tpu.memory_space<vmem>>, vector<2x8x128xf32>
      tpu.vector_store %arg25[%c0_102, %c0_103, %c0_104], %207 {strides = array<i32>} : memref<2x8x128xf32, #tpu.memory_space<vmem>>, vector<2x8x128xf32>,
    } else {
    }
    %c0 = arith.constant 0 : index
    %c0_1 = arith.constant 0 : index
    %c0_2 = arith.constant 0 : index
    %3 = vector.load %arg25[%c0, %c0_1, %c0_2] : memref<2x8x128xf32, #tpu.memory_space<vmem>>, vector<2x8x128xf32>
    %4 = vector.shape_cast %3 : vector<2x8x128xf32> to vector<16x128xf32>
    %5 = vector.shape_cast %3 : vector<2x8x128xf32> to vector<2x1x8x128xf32>
    %6 = vector.shape_cast %5 : vector<2x1x8x128xf32> to vector<2x1x8x128xf32>
    %7 = vector.broadcast %6 : vector<2x1x8x128xf32> to vector<2x2x8x128xf32>
    %8 = vector.shape_cast %7 : vector<2x2x8x128xf32> to vector<4x8x128xf32>
    %c0_3 = arith.constant 0 : index
    %c0_4 = arith.constant 0 : index
    %c0_5 = arith.constant 0 : index
    %c0_6 = arith.constant 0 : index
    %9 = vector.load %arg6[%c0_3, %c0_4, %c0_5, %c0_6] : memref<1x2x128x16xf32, #tpu.memory_space<vmem>>, vector<1x2x128x16xf32>
    %10 = vector.shape_cast %9 : vector<1x2x128x16xf32> to vector<2x128x16xf32>
    %11 = vector.shape_cast %10 : vector<2x128x16xf32> to vector<1x2x128x16xf32>
    %12 = vector.shape_cast %11 : vector<1x2x128x16xf32> to vector<1x2x128x16xf32>
    %13 = vector.broadcast %12 : vector<1x2x128x16xf32> to vector<2x2x128x16xf32>
    %14 = vector.shape_cast %13 : vector<2x2x128x16xf32> to vector<4x128x16xf32>
    %c0_7 = arith.constant 0 : index
    %c0_8 = arith.constant 0 : index
    %c0_9 = arith.constant 0 : index
    %15 = vector.load %arg7[%c0_7, %c0_8, %c0_9] : memref<1x2x16xf32, #tpu.memory_space<vmem>>, vector<1x2x16xf32>
    %16 = vector.shape_cast %15 : vector<1x2x16xf32> to vector<2x16xf32>
    %17 = vector.shape_cast %16 : vector<2x16xf32> to vector<2x1x16xf32>
    %18 = vector.shape_cast %17 : vector<2x1x16xf32> to vector<1x2x1x16xf32>
    %19 = vector.shape_cast %18 : vector<1x2x1x16xf32> to vector<1x2x1x16xf32>
    %20 = vector.broadcast %19 : vector<1x2x1x16xf32> to vector<2x2x1x16xf32>
    %21 = vector.shape_cast %20 : vector<2x2x1x16xf32> to vector<4x1x16xf32>
    %c0_10 = arith.constant 0 : index
    %c0_11 = arith.constant 0 : index
    %c0_12 = arith.constant 0 : index
    %c0_13 = arith.constant 0 : index
    %22 = vector.load %arg8[%c0_10, %c0_11, %c0_12, %c0_13] : memref<1x2x128x16xf32, #tpu.memory_space<vmem>>, vector<1x2x128x16xf32>
    %23 = vector.shape_cast %22 : vector<1x2x128x16xf32> to vector<2x128x16xf32>
    %24 = vector.shape_cast %23 : vector<2x128x16xf32> to vector<1x2x128x16xf32>
    %25 = vector.shape_cast %24 : vector<1x2x128x16xf32> to vector<1x2x128x16xf32>
    %26 = vector.broadcast %25 : vector<1x2x128x16xf32> to vector<2x2x128x16xf32>
    %27 = vector.shape_cast %26 : vector<2x2x128x16xf32> to vector<4x128x16xf32>
    %c0_14 = arith.constant 0 : index
    %c0_15 = arith.constant 0 : index
    %c0_16 = arith.constant 0 : index
    %28 = vector.load %arg9[%c0_14, %c0_15, %c0_16] : memref<1x2x16xf32, #tpu.memory_space<vmem>>, vector<1x2x16xf32>
    %29 = vector.shape_cast %28 : vector<1x2x16xf32> to vector<2x16xf32>
    %30 = vector.shape_cast %29 : vector<2x16xf32> to vector<2x1x16xf32>
    %31 = vector.shape_cast %30 : vector<2x1x16xf32> to vector<1x2x1x16xf32>
    %32 = vector.shape_cast %31 : vector<1x2x1x16xf32> to vector<1x2x1x16xf32>
    %33 = vector.broadcast %32 : vector<1x2x1x16xf32> to vector<2x2x1x16xf32>
    %34 = vector.shape_cast %33 : vector<2x2x1x16xf32> to vector<4x1x16xf32>
    %c0_17 = arith.constant 0 : index
    %c0_18 = arith.constant 0 : index
    %c0_19 = arith.constant 0 : index
    %c0_20 = arith.constant 0 : index
    %35 = vector.load %arg10[%c0_17, %c0_18, %c0_19, %c0_20] : memref<1x2x128x16xf32, #tpu.memory_space<vmem>>, vector<1x2x128x16xf32>
    %36 = vector.shape_cast %35 : vector<1x2x128x16xf32> to vector<2x128x16xf32>
    %37 = vector.shape_cast %36 : vector<2x128x16xf32> to vector<1x2x128x16xf32>
    %38 = vector.shape_cast %37 : vector<1x2x128x16xf32> to vector<1x2x128x16xf32>
    %39 = vector.broadcast %38 : vector<1x2x128x16xf32> to vector<2x2x128x16xf32>
    %40 = vector.shape_cast %39 : vector<2x2x128x16xf32> to vector<4x128x16xf32>
    %c0_21 = arith.constant 0 : index
    %c0_22 = arith.constant 0 : index
    %c0_23 = arith.constant 0 : index
    %41 = vector.load %arg11[%c0_21, %c0_22, %c0_23] : memref<1x2x16xf32, #tpu.memory_space<vmem>>, vector<1x2x16xf32>
    %42 = vector.shape_cast %41 : vector<1x2x16xf32> to vector<2x16xf32>
    %43 = vector.shape_cast %42 : vector<2x16xf32> to vector<2x1x16xf32>
    %44 = vector.shape_cast %43 : vector<2x1x16xf32> to vector<1x2x1x16xf32>
    %45 = vector.shape_cast %44 : vector<1x2x1x16xf32> to vector<1x2x1x16xf32>
    %46 = vector.broadcast %45 : vector<1x2x1x16xf32> to vector<2x2x1x16xf32>
    %47 = vector.shape_cast %46 : vector<2x2x1x16xf32> to vector<4x1x16xf32>
    "tpu.trace_start"() <{level = 10 : i32, message = "gsp,gpd->gsd"}> : () -> ()
    %cst = arith.constant dense<0.000000e+00> : vector<4x8x16xf32>
    %48 = tpu.matmul %8, %14, %cst {dimension_numbers = #tpu.dot_dimension_numbers<[2], [1], [1], [2], [0, 0, 0, 1, 1, 2], [0], [0]>} : vector<4x8x128xf32>, vector<4x128x16xf32>, vector<4x8x16xf32> -> vector<4x8x16xf32>
    "tpu.trace_stop"() : () -> ()
    %49 = vector.broadcast %21 : vector<4x1x16xf32> to vector<4x8x16xf32>
    %50 = arith.addf %48, %49 : vector<4x8x16xf32>
    "tpu.trace_start"() <{level = 10 : i32, message = "gsp,gpd->gsd"}> : () -> ()
    %cst_24 = arith.constant dense<0.000000e+00> : vector<4x8x16xf32>
    %51 = tpu.matmul %8, %27, %cst_24 {dimension_numbers = #tpu.dot_dimension_numbers<[2], [1], [1], [2], [0, 0, 0, 1, 1, 2], [0], [0]>} : vector<4x8x128xf32>, vector<4x128x16xf32>, vector<4x8x16xf32> -> vector<4x8x16xf32>
    "tpu.trace_stop"() : () -> ()
    %52 = vector.broadcast %34 : vector<4x1x16xf32> to vector<4x8x16xf32>
    %53 = arith.addf %51, %52 : vector<4x8x16xf32>
    "tpu.trace_start"() <{level = 10 : i32, message = "gsp,gpd->gsd"}> : () -> ()
    %cst_25 = arith.constant dense<0.000000e+00> : vector<4x8x16xf32>
    %54 = tpu.matmul %8, %40, %cst_25 {dimension_numbers = #tpu.dot_dimension_numbers<[2], [1], [1], [2], [0, 0, 0, 1, 1, 2], [0], [0]>} : vector<4x8x128xf32>, vector<4x128x16xf32>, vector<4x8x16xf32> -> vector<4x8x16xf32>
    "tpu.trace_stop"() : () -> ()
    %55 = vector.broadcast %47 : vector<4x1x16xf32> to vector<4x8x16xf32>
    %56 = arith.addf %54, %55 : vector<4x8x16xf32>
    "tpu.trace_start"() <{level = 10 : i32, message = "gsd,gtd->gst"}> : () -> ()
    %cst_26 = arith.constant dense<0.000000e+00> : vector<4x8x8xf32>
    %57 = tpu.matmul %50, %53, %cst_26 {dimension_numbers = #tpu.dot_dimension_numbers<[2], [2], [1], [1], [0, 0, 0, 1, 1, 1], [0], [0]>} : vector<4x8x16xf32>, vector<4x8x16xf32>, vector<4x8x8xf32> -> vector<4x8x8xf32>
    "tpu.trace_stop"() : () -> ()
    %cst_27 = arith.constant 2.500000e-01 : f32
    %58 = vector.broadcast %cst_27 : f32 to vector<4x8x8xf32>
    %59 = arith.mulf %57, %58 : vector<4x8x8xf32>
    %c0_28 = arith.constant 0 : index
    %c0_29 = arith.constant 0 : index
    %c0_30 = arith.constant 0 : index
    %60 = vector.load %arg3[%c0_28, %c0_29, %c0_30] : memref<4x1x8xf32, #tpu.memory_space<vmem>>, vector<4x1x8xf32>
    %61 = vector.broadcast %60 : vector<4x1x8xf32> to vector<4x8x8xf32>
    %62 = arith.addf %59, %61 : vector<4x8x8xf32>
    %cst_31 = arith.constant dense<0xFF800000> : vector<4x8xf32>
    %63 = vector.multi_reduction <maximumf>, %62, %cst_31 [2] : vector<4x8x8xf32> to vector<4x8xf32>
    %64 = vector.shape_cast %63 : vector<4x8xf32> to vector<4x8x1xf32>
    %65 = vector.broadcast %64 : vector<4x8x1xf32> to vector<4x8x8xf32>
    %66 = arith.subf %62, %65 : vector<4x8x8xf32>
    %67 = math.exp %66 : vector<4x8x8xf32>
    %cst_32 = arith.constant dense<0.000000e+00> : vector<4x8xf32>
    %68 = vector.multi_reduction <add>, %67, %cst_32 [2] : vector<4x8x8xf32> to vector<4x8xf32>
    %69 = vector.shape_cast %68 : vector<4x8xf32> to vector<4x8x1xf32>
    %70 = tpu.reciprocal %69 {approx = true} : vector<4x8x1xf32> -> vector<4x8x1xf32>
    %71 = vector.broadcast %70 : vector<4x8x1xf32> to vector<4x8x8xf32>
    %72 = arith.mulf %67, %71 : vector<4x8x8xf32>
    "tpu.trace_start"() <{level = 10 : i32, message = "gst,gtd->gsd"}> : () -> ()
    %cst_33 = arith.constant dense<0.000000e+00> : vector<4x8x16xf32>
    %73 = tpu.matmul %72, %56, %cst_33 {dimension_numbers = #tpu.dot_dimension_numbers<[2], [1], [1], [2], [0, 0, 0, 1, 1, 2], [0], [0]>} : vector<4x8x8xf32>, vector<4x8x16xf32>, vector<4x8x16xf32> -> vector<4x8x16xf32>
    "tpu.trace_stop"() : () -> ()
    %c0_34 = arith.constant 0 : index
    %c0_35 = arith.constant 0 : index
    %c0_36 = arith.constant 0 : index
    %c0_37 = arith.constant 0 : index
    %74 = vector.load %arg12[%c0_34, %c0_35, %c0_36, %c0_37] : memref<1x2x16x128xf32, #tpu.memory_space<vmem>>, vector<1x2x16x128xf32>
    %75 = vector.shape_cast %74 : vector<1x2x16x128xf32> to vector<2x16x128xf32>
    %76 = vector.shape_cast %75 : vector<2x16x128xf32> to vector<1x2x16x128xf32>
    %77 = vector.shape_cast %76 : vector<1x2x16x128xf32> to vector<1x2x16x128xf32>
    %78 = vector.broadcast %77 : vector<1x2x16x128xf32> to vector<2x2x16x128xf32>
    %79 = vector.shape_cast %78 : vector<2x2x16x128xf32> to vector<4x16x128xf32>
    "tpu.trace_start"() <{level = 10 : i32, message = "gsd,gdp->gsp"}> : () -> ()
    %cst_38 = arith.constant dense<0.000000e+00> : vector<4x8x128xf32>
    %80 = tpu.matmul %73, %79, %cst_38 {dimension_numbers = #tpu.dot_dimension_numbers<[2], [1], [1], [2], [0, 0, 0, 1, 1, 2], [0], [0]>} : vector<4x8x16xf32>, vector<4x16x128xf32>, vector<4x8x128xf32> -> vector<4x8x128xf32>
    "tpu.trace_stop"() : () -> ()
    %81 = vector.shape_cast %80 : vector<4x8x128xf32> to vector<2x2x8x128xf32>
    %cst_39 = arith.constant dense<0.000000e+00> : vector<2x8x128xf32>
    %82 = vector.multi_reduction <add>, %81, %cst_39 [1] : vector<2x2x8x128xf32> to vector<2x8x128xf32>
    %c0_40 = arith.constant 0 : index
    %c0_41 = arith.constant 0 : index
    %c0_42 = arith.constant 0 : index
    %83 = vector.load %arg13[%c0_40, %c0_41, %c0_42] : memref<1x1x128xf32, #tpu.memory_space<vmem>>, vector<1x1x128xf32>
    %84 = vector.shape_cast %83 : vector<1x1x128xf32> to vector<1x128xf32>
    %85 = vector.shape_cast %84 : vector<1x128xf32> to vector<1x1x128xf32>
    %86 = vector.broadcast %85 : vector<1x1x128xf32> to vector<2x8x128xf32>
    %87 = arith.addf %82, %86 : vector<2x8x128xf32>
    %88 = vector.shape_cast %87 : vector<2x8x128xf32> to vector<16x128xf32>
    %89 = arith.addf %4, %88 : vector<16x128xf32>
    %c0_43 = arith.constant 0 : index
    %c0_44 = arith.constant 0 : index
    %c0_45 = arith.constant 0 : index
    %90 = vector.load %arg14[%c0_43, %c0_44, %c0_45] : memref<1x1x128xf32, #tpu.memory_space<vmem>>, vector<1x1x128xf32>
    %91 = vector.shape_cast %90 : vector<1x1x128xf32> to vector<1x128xf32>
    %c0_46 = arith.constant 0 : index
    %c0_47 = arith.constant 0 : index
    %c0_48 = arith.constant 0 : index
    %92 = vector.load %arg15[%c0_46, %c0_47, %c0_48] : memref<1x1x128xf32, #tpu.memory_space<vmem>>, vector<1x1x128xf32>
    %93 = vector.shape_cast %92 : vector<1x1x128xf32> to vector<1x128xf32>
    %cst_49 = arith.constant dense<0.000000e+00> : vector<16xf32>
    %94 = vector.multi_reduction <add>, %89, %cst_49 [1] : vector<16x128xf32> to vector<16xf32>
    %95 = vector.shape_cast %94 : vector<16xf32> to vector<16x1xf32>
    %cst_50 = arith.constant 3.125000e-02 : f32
    %96 = vector.broadcast %cst_50 : f32 to vector<16x1xf32>
    %97 = arith.mulf %95, %96 : vector<16x1xf32>
    %98 = arith.mulf %89, %89 : vector<16x128xf32>
    %cst_51 = arith.constant dense<0.000000e+00> : vector<16xf32>
    %99 = vector.multi_reduction <add>, %98, %cst_51 [1] : vector<16x128xf32> to vector<16xf32>
    %100 = vector.shape_cast %99 : vector<16xf32> to vector<16x1xf32>
    %cst_52 = arith.constant 3.125000e-02 : f32
    %101 = vector.broadcast %cst_52 : f32 to vector<16x1xf32>
    %102 = arith.mulf %100, %101 : vector<16x1xf32>
    %103 = arith.mulf %97, %97 : vector<16x1xf32>
    %104 = arith.subf %102, %103 : vector<16x1xf32>
    %cst_53 = arith.constant 0.000000e+00 : f32
    %105 = vector.broadcast %cst_53 : f32 to vector<16x1xf32>
    %106 = arith.maximumf %104, %105 : vector<16x1xf32>
    %107 = vector.broadcast %97 : vector<16x1xf32> to vector<16x128xf32>
    %108 = arith.subf %89, %107 : vector<16x128xf32>
    %cst_54 = arith.constant 9.99999996E-13 : f32
    %109 = vector.broadcast %cst_54 : f32 to vector<16x1xf32>
    %110 = arith.addf %106, %109 : vector<16x1xf32>
    %111 = math.rsqrt %110 : vector<16x1xf32>
    %112 = vector.broadcast %111 : vector<16x1xf32> to vector<16x128xf32>
    %113 = arith.mulf %108, %112 : vector<16x128xf32>
    %114 = vector.broadcast %91 : vector<1x128xf32> to vector<16x128xf32>
    %115 = arith.mulf %113, %114 : vector<16x128xf32>
    %116 = vector.broadcast %93 : vector<1x128xf32> to vector<16x128xf32>
    %117 = arith.addf %115, %116 : vector<16x128xf32>
    %c0_55 = arith.constant 0 : index
    %c0_56 = arith.constant 0 : index
    %c0_57 = arith.constant 0 : index
    %118 = vector.load %arg16[%c0_55, %c0_56, %c0_57] : memref<1x128x128xf32, #tpu.memory_space<vmem>>, vector<1x128x128xf32>
    %119 = vector.shape_cast %118 : vector<1x128x128xf32> to vector<128x128xf32>
    %cst_58 = arith.constant dense<0.000000e+00> : vector<16x128xf32>
    %120 = tpu.matmul %117, %119, %cst_58 {dimension_numbers = #tpu.dot_dimension_numbers<[1], [0], [0], [1], [0, 0, 1, 1], [], []>} : vector<16x128xf32>, vector<128x128xf32>, vector<16x128xf32> -> vector<16x128xf32>
    %c0_59 = arith.constant 0 : index
    %c0_60 = arith.constant 0 : index
    %c0_61 = arith.constant 0 : index
    %121 = vector.load %arg17[%c0_59, %c0_60, %c0_61] : memref<1x1x128xf32, #tpu.memory_space<vmem>>, vector<1x1x128xf32>
    %122 = vector.shape_cast %121 : vector<1x1x128xf32> to vector<1x128xf32>
    %123 = vector.broadcast %122 : vector<1x128xf32> to vector<16x128xf32>
    %124 = arith.addf %120, %123 : vector<16x128xf32>
    %cst_62 = arith.constant 5.000000e-01 : f32
    %125 = vector.broadcast %cst_62 : f32 to vector<16x128xf32>
    %126 = arith.mulf %125, %124 : vector<16x128xf32>
    %cst_63 = arith.constant 4.471500e-02 : f32
    %127 = vector.broadcast %cst_63 : f32 to vector<16x128xf32>
    %128 = arith.mulf %127, %124 : vector<16x128xf32>
    %129 = arith.mulf %128, %124 : vector<16x128xf32>
    %130 = arith.mulf %129, %124 : vector<16x128xf32>
    %131 = arith.addf %124, %130 : vector<16x128xf32>
    %cst_64 = arith.constant 0.797884583 : f32
    %132 = vector.broadcast %cst_64 : f32 to vector<16x128xf32>
    %133 = arith.mulf %132, %131 : vector<16x128xf32>
    %134 = math.tanh %133 : vector<16x128xf32>
    %cst_65 = arith.constant 1.000000e+00 : f32
    %135 = vector.broadcast %cst_65 : f32 to vector<16x128xf32>
    %136 = arith.addf %135, %134 : vector<16x128xf32>
    %137 = arith.mulf %126, %136 : vector<16x128xf32>
    %c0_66 = arith.constant 0 : index
    %c0_67 = arith.constant 0 : index
    %c0_68 = arith.constant 0 : index
    %138 = vector.load %arg18[%c0_66, %c0_67, %c0_68] : memref<1x128x128xf32, #tpu.memory_space<vmem>>, vector<1x128x128xf32>
    %139 = vector.shape_cast %138 : vector<1x128x128xf32> to vector<128x128xf32>
    %cst_69 = arith.constant dense<0.000000e+00> : vector<16x128xf32>
    %140 = tpu.matmul %137, %139, %cst_69 {dimension_numbers = #tpu.dot_dimension_numbers<[1], [0], [0], [1], [0, 0, 1, 1], [], []>} : vector<16x128xf32>, vector<128x128xf32>, vector<16x128xf32> -> vector<16x128xf32>
    %c0_70 = arith.constant 0 : index
    %c0_71 = arith.constant 0 : index
    %c0_72 = arith.constant 0 : index
    %141 = vector.load %arg19[%c0_70, %c0_71, %c0_72] : memref<1x1x128xf32, #tpu.memory_space<vmem>>, vector<1x1x128xf32>
    %142 = vector.shape_cast %141 : vector<1x1x128xf32> to vector<1x128xf32>
    %143 = vector.broadcast %142 : vector<1x128xf32> to vector<16x128xf32>
    %144 = arith.addf %140, %143 : vector<16x128xf32>
    %145 = arith.addf %117, %144 : vector<16x128xf32>
    %c0_73 = arith.constant 0 : index
    %c0_74 = arith.constant 0 : index
    %c0_75 = arith.constant 0 : index
    %146 = vector.load %arg20[%c0_73, %c0_74, %c0_75] : memref<1x1x128xf32, #tpu.memory_space<vmem>>, vector<1x1x128xf32>
    %147 = vector.shape_cast %146 : vector<1x1x128xf32> to vector<1x128xf32>
    %c0_76 = arith.constant 0 : index
    %c0_77 = arith.constant 0 : index
    %c0_78 = arith.constant 0 : index
    %148 = vector.load %arg21[%c0_76, %c0_77, %c0_78] : memref<1x1x128xf32, #tpu.memory_space<vmem>>, vector<1x1x128xf32>
    %149 = vector.shape_cast %148 : vector<1x1x128xf32> to vector<1x128xf32>
    %cst_79 = arith.constant dense<0.000000e+00> : vector<16xf32>
    %150 = vector.multi_reduction <add>, %145, %cst_79 [1] : vector<16x128xf32> to vector<16xf32>
    %151 = vector.shape_cast %150 : vector<16xf32> to vector<16x1xf32>
    %cst_80 = arith.constant 3.125000e-02 : f32
    %152 = vector.broadcast %cst_80 : f32 to vector<16x1xf32>
    %153 = arith.mulf %151, %152 : vector<16x1xf32>
    %154 = arith.mulf %145, %145 : vector<16x128xf32>
    %cst_81 = arith.constant dense<0.000000e+00> : vector<16xf32>
    %155 = vector.multi_reduction <add>, %154, %cst_81 [1] : vector<16x128xf32> to vector<16xf32>
    %156 = vector.shape_cast %155 : vector<16xf32> to vector<16x1xf32>
    %cst_82 = arith.constant 3.125000e-02 : f32
    %157 = vector.broadcast %cst_82 : f32 to vector<16x1xf32>
    %158 = arith.mulf %156, %157 : vector<16x1xf32>
    %159 = arith.mulf %153, %153 : vector<16x1xf32>
    %160 = arith.subf %158, %159 : vector<16x1xf32>
    %cst_83 = arith.constant 0.000000e+00 : f32
    %161 = vector.broadcast %cst_83 : f32 to vector<16x1xf32>
    %162 = arith.maximumf %160, %161 : vector<16x1xf32>
    %163 = vector.broadcast %153 : vector<16x1xf32> to vector<16x128xf32>
    %164 = arith.subf %145, %163 : vector<16x128xf32>
    %cst_84 = arith.constant 9.99999996E-13 : f32
    %165 = vector.broadcast %cst_84 : f32 to vector<16x1xf32>
    %166 = arith.addf %162, %165 : vector<16x1xf32>
    %167 = math.rsqrt %166 : vector<16x1xf32>
    %168 = vector.broadcast %167 : vector<16x1xf32> to vector<16x128xf32>
    %169 = arith.mulf %164, %168 : vector<16x128xf32>
    %170 = vector.broadcast %147 : vector<1x128xf32> to vector<16x128xf32>
    %171 = arith.mulf %169, %170 : vector<16x128xf32>
    %172 = vector.broadcast %149 : vector<1x128xf32> to vector<16x128xf32>
    %173 = arith.addf %171, %172 : vector<16x128xf32>
    %174 = vector.shape_cast %173 : vector<16x128xf32> to vector<2x8x128xf32>
    %c0_85 = arith.constant 0 : index
    %c0_86 = arith.constant 0 : index
    %c0_87 = arith.constant 0 : index
    %175 = vector.load %arg25[%c0_85, %c0_86, %c0_87] : memref<2x8x128xf32, #tpu.memory_space<vmem>>, vector<2x8x128xf32>
    tpu.vector_store %arg25[%c0_85, %c0_86, %c0_87], %174 {strides = array<i32>} : memref<2x8x128xf32, #tpu.memory_space<vmem>>, vector<2x8x128xf32>,
    %c1_i32 = arith.constant 1 : i32
    %176 = arith.cmpi eq, %arg1, %c1_i32 : i32
    %177 = arith.extui %176 : i1 to i32
    %c0_i32_88 = arith.constant 0 : i32
    %178 = arith.cmpi ne, %177, %c0_i32_88 : i32
    scf.if %178 {
      %179 = vector.shape_cast %173 : vector<16x128xf32> to vector<2x8x128xf32>
      %180 = vector.extract_strided_slice %179 {offsets = [0, 0, 0], sizes = [2, 1, 128], strides = [1, 1, 1]} : vector<2x8x128xf32> to vector<2x1x128xf32>
      %181 = vector.shape_cast %180 : vector<2x1x128xf32> to vector<2x128xf32>
      %c0_89 = arith.constant 0 : index
      %c0_90 = arith.constant 0 : index
      %182 = vector.load %arg22[%c0_89, %c0_90] : memref<128x128xf32, #tpu.memory_space<vmem>>, vector<128x128xf32>
      %cst_91 = arith.constant dense<0.000000e+00> : vector<2x128xf32>
      %183 = tpu.matmul %181, %182, %cst_91 {dimension_numbers = #tpu.dot_dimension_numbers<[1], [0], [0], [1], [0, 0, 1, 1], [], []>} : vector<2x128xf32>, vector<128x128xf32>, vector<2x128xf32> -> vector<2x128xf32>
      %c0_92 = arith.constant 0 : index
      %c0_93 = arith.constant 0 : index
      %184 = vector.load %arg23[%c0_92, %c0_93] : memref<1x128xf32, #tpu.memory_space<vmem>>, vector<1x128xf32>
      %185 = vector.broadcast %184 : vector<1x128xf32> to vector<2x128xf32>
      %186 = arith.addf %183, %185 : vector<2x128xf32>
      %c0_94 = arith.constant 0 : index
      %c0_95 = arith.constant 0 : index
      %c0_96 = arith.constant 0 : index
      %187 = vector.load %arg24[%c0_94, %c0_95, %c0_96] : memref<1x2x128xf32, #tpu.memory_space<vmem>>, vector<1x2x128xf32>
      %188 = vector.shape_cast %187 : vector<1x2x128xf32> to vector<2x128xf32>
      %189 = vector.shape_cast %186 : vector<2x128xf32> to vector<1x2x128xf32>
      tpu.vector_store %arg24[%c0_94, %c0_95, %c0_96], %189 {strides = array<i32>} : memref<1x2x128xf32, #tpu.memory_space<vmem>>, vector<1x2x128xf32>,
    } else {
    }
    return
  }
  func.func @transform_0(%arg0: i32, %arg1: i32) -> (i32, i32, i32) {
    %c0_i32 = arith.constant 0 : i32
    %c0_i32_0 = arith.constant 0 : i32
    %c0_i32_1 = arith.constant 0 : i32
    return %arg0, %c0_i32, %c0_i32_0 : i32, i32, i32
  }
  func.func @transform_1(%arg0: i32, %arg1: i32) -> (i32, i32, i32) {
    %c0_i32 = arith.constant 0 : i32
    %c0_i32_0 = arith.constant 0 : i32
    %c0_i32_1 = arith.constant 0 : i32
    return %arg0, %c0_i32, %c0_i32_0 : i32, i32, i32
  }
  func.func @transform_2(%arg0: i32, %arg1: i32) -> (i32, i32) {
    %c0_i32 = arith.constant 0 : i32
    %c0_i32_0 = arith.constant 0 : i32
    %c0_i32_1 = arith.constant 0 : i32
    return %c0_i32, %c0_i32_0 : i32, i32
  }
  func.func @transform_3(%arg0: i32, %arg1: i32) -> (i32, i32) {
    %c0_i32 = arith.constant 0 : i32
    %c0_i32_0 = arith.constant 0 : i32
    %c0_i32_1 = arith.constant 0 : i32
    return %c0_i32, %c0_i32_0 : i32, i32
  }
  func.func @transform_4(%arg0: i32, %arg1: i32) -> (i32, i32, i32, i32) {
    %c0_i32 = arith.constant 0 : i32
    %c0_i32_0 = arith.constant 0 : i32
    %c0_i32_1 = arith.constant 0 : i32
    %c0_i32_2 = arith.constant 0 : i32
    return %arg1, %c0_i32, %c0_i32_0, %c0_i32_1 : i32, i32, i32, i32
  }
  func.func @transform_5(%arg0: i32, %arg1: i32) -> (i32, i32, i32) {
    %c0_i32 = arith.constant 0 : i32
    %c0_i32_0 = arith.constant 0 : i32
    %c0_i32_1 = arith.constant 0 : i32
    return %arg1, %c0_i32, %c0_i32_0 : i32, i32, i32
  }
  func.func @transform_6(%arg0: i32, %arg1: i32) -> (i32, i32, i32, i32) {
    %c0_i32 = arith.constant 0 : i32
    %c0_i32_0 = arith.constant 0 : i32
    %c0_i32_1 = arith.constant 0 : i32
    %c0_i32_2 = arith.constant 0 : i32
    return %arg1, %c0_i32, %c0_i32_0, %c0_i32_1 : i32, i32, i32, i32
  }
  func.func @transform_7(%arg0: i32, %arg1: i32) -> (i32, i32, i32) {
    %c0_i32 = arith.constant 0 : i32
    %c0_i32_0 = arith.constant 0 : i32
    %c0_i32_1 = arith.constant 0 : i32
    return %arg1, %c0_i32, %c0_i32_0 : i32, i32, i32
  }
  func.func @transform_8(%arg0: i32, %arg1: i32) -> (i32, i32, i32, i32) {
    %c0_i32 = arith.constant 0 : i32
    %c0_i32_0 = arith.constant 0 : i32
    %c0_i32_1 = arith.constant 0 : i32
    %c0_i32_2 = arith.constant 0 : i32
    return %arg1, %c0_i32, %c0_i32_0, %c0_i32_1 : i32, i32, i32, i32
  }
  func.func @transform_9(%arg0: i32, %arg1: i32) -> (i32, i32, i32) {
    %c0_i32 = arith.constant 0 : i32
    %c0_i32_0 = arith.constant 0 : i32
    %c0_i32_1 = arith.constant 0 : i32
    return %arg1, %c0_i32, %c0_i32_0 : i32, i32, i32
  }
  func.func @transform_10(%arg0: i32, %arg1: i32) -> (i32, i32, i32, i32) {
    %c0_i32 = arith.constant 0 : i32
    %c0_i32_0 = arith.constant 0 : i32
    %c0_i32_1 = arith.constant 0 : i32
    %c0_i32_2 = arith.constant 0 : i32
    return %arg1, %c0_i32, %c0_i32_0, %c0_i32_1 : i32, i32, i32, i32
  }
  func.func @transform_11(%arg0: i32, %arg1: i32) -> (i32, i32, i32) {
    %c0_i32 = arith.constant 0 : i32
    %c0_i32_0 = arith.constant 0 : i32
    %c0_i32_1 = arith.constant 0 : i32
    return %arg1, %c0_i32, %c0_i32_0 : i32, i32, i32
  }
  func.func @transform_12(%arg0: i32, %arg1: i32) -> (i32, i32, i32) {
    %c0_i32 = arith.constant 0 : i32
    %c0_i32_0 = arith.constant 0 : i32
    %c0_i32_1 = arith.constant 0 : i32
    return %arg1, %c0_i32, %c0_i32_0 : i32, i32, i32
  }
  func.func @transform_13(%arg0: i32, %arg1: i32) -> (i32, i32, i32) {
    %c0_i32 = arith.constant 0 : i32
    %c0_i32_0 = arith.constant 0 : i32
    %c0_i32_1 = arith.constant 0 : i32
    return %arg1, %c0_i32, %c0_i32_0 : i32, i32, i32
  }
  func.func @transform_14(%arg0: i32, %arg1: i32) -> (i32, i32, i32) {
    %c0_i32 = arith.constant 0 : i32
    %c0_i32_0 = arith.constant 0 : i32
    %c0_i32_1 = arith.constant 0 : i32
    return %arg1, %c0_i32, %c0_i32_0 : i32, i32, i32
  }
  func.func @transform_15(%arg0: i32, %arg1: i32) -> (i32, i32, i32) {
    %c0_i32 = arith.constant 0 : i32
    %c0_i32_0 = arith.constant 0 : i32
    %c0_i32_1 = arith.constant 0 : i32
    return %arg1, %c0_i32, %c0_i32_0 : i32, i32, i32
  }
  func.func @transform_16(%arg0: i32, %arg1: i32) -> (i32, i32, i32) {
    %c0_i32 = arith.constant 0 : i32
    %c0_i32_0 = arith.constant 0 : i32
    %c0_i32_1 = arith.constant 0 : i32
    return %arg1, %c0_i32, %c0_i32_0 : i32, i32, i32
  }
  func.func @transform_17(%arg0: i32, %arg1: i32) -> (i32, i32, i32) {
    %c0_i32 = arith.constant 0 : i32
    %c0_i32_0 = arith.constant 0 : i32
    %c0_i32_1 = arith.constant 0 : i32
    return %arg1, %c0_i32, %c0_i32_0 : i32, i32, i32
  }
  func.func @transform_18(%arg0: i32, %arg1: i32) -> (i32, i32, i32) {
    %c0_i32 = arith.constant 0 : i32
    %c0_i32_0 = arith.constant 0 : i32
    %c0_i32_1 = arith.constant 0 : i32
    return %arg1, %c0_i32, %c0_i32_0 : i32, i32, i32
  }
  func.func @transform_19(%arg0: i32, %arg1: i32) -> (i32, i32, i32) {
    %c0_i32 = arith.constant 0 : i32
    %c0_i32_0 = arith.constant 0 : i32
    %c0_i32_1 = arith.constant 0 : i32
    return %arg1, %c0_i32, %c0_i32_0 : i32, i32, i32
  }
  func.func @transform_20(%arg0: i32, %arg1: i32) -> (i32, i32) {
    %c0_i32 = arith.constant 0 : i32
    %c0_i32_0 = arith.constant 0 : i32
    %c0_i32_1 = arith.constant 0 : i32
    return %c0_i32, %c0_i32_0 : i32, i32
  }
  func.func @transform_21(%arg0: i32, %arg1: i32) -> (i32, i32) {
    %c0_i32 = arith.constant 0 : i32
    %c0_i32_0 = arith.constant 0 : i32
    %c0_i32_1 = arith.constant 0 : i32
    return %c0_i32, %c0_i32_0 : i32, i32
  }
  func.func @transform_22(%arg0: i32, %arg1: i32) -> (i32, i32, i32) {
    %c0_i32 = arith.constant 0 : i32
    %c0_i32_0 = arith.constant 0 : i32
    %c0_i32_1 = arith.constant 0 : i32
    return %arg0, %c0_i32, %c0_i32_0 : i32, i32, i32
  }
}

</mosaic_0001>

<llo_original>
// kernel: bert_model_forward.1
$region0: #{bert_model_forward.1}
  #allocation0 [shape = 'u32[]', space=smem, size = 0x4, offset = 0x4, fixed_abs, tag = 'smem constant byte address 0x4 - core index']
  #allocation1 [shape = 'u32[72,128]{1,0:T(1,128)}', space=vmem, size = 0x9000, scoped, tag = 'internal scratch']
  #allocation2 [shape = 'f32[2,8,128]{2,1,0:T(8,128)}', space=vmem, size = 0x2000, scoped, tag = 'scratch operand']
  %s0 = inlined_call_operand.vmem [shape: f32[4,8,128], index: 0, kind: input, shape index: {}]
  %s1 = inlined_call_operand.vmem [shape: f32[8,1,8], index: 1, kind: input, shape index: {}]
  %s2 = inlined_call_operand.vmem [shape: f32[1,128], index: 2, kind: input, shape index: {}]
  %s3 = inlined_call_operand.vmem [shape: f32[1,128], index: 3, kind: input, shape index: {}]
  %s4 = inlined_call_operand.vmem [shape: f32[2,2,128,16], index: 4, kind: input, shape index: {}]
  %s5 = inlined_call_operand.vmem [shape: f32[2,2,16], index: 5, kind: input, shape index: {}]
  %s6 = inlined_call_operand.vmem [shape: f32[2,2,128,16], index: 6, kind: input, shape index: {}]
  %s7 = inlined_call_operand.vmem [shape: f32[2,2,16], index: 7, kind: input, shape index: {}]
  %s8 = inlined_call_operand.vmem [shape: f32[2,2,128,16], index: 8, kind: input, shape index: {}]
  %s9 = inlined_call_operand.vmem [shape: f32[2,2,16], index: 9, kind: input, shape index: {}]
  %s10 = inlined_call_operand.vmem [shape: f32[2,2,16,128], index: 10, kind: input, shape index: {}]
  %s11 = inlined_call_operand.vmem [shape: f32[2,1,128], index: 11, kind: input, shape index: {}]
  %s12 = inlined_call_operand.vmem [shape: f32[2,1,128], index: 12, kind: input, shape index: {}]
  %s13 = inlined_call_operand.vmem [shape: f32[2,1,128], index: 13, kind: input, shape index: {}]
  %s14 = inlined_call_operand.vmem [shape: f32[2,128,128], index: 14, kind: input, shape index: {}]
  %s15 = inlined_call_operand.vmem [shape: f32[2,1,128], index: 15, kind: input, shape index: {}]
  %s16 = inlined_call_operand.vmem [shape: f32[2,128,128], index: 16, kind: input, shape index: {}]
  %s17 = inlined_call_operand.vmem [shape: f32[2,1,128], index: 17, kind: input, shape index: {}]
  %s18 = inlined_call_operand.vmem [shape: f32[2,1,128], index: 18, kind: input, shape index: {}]
  %s19 = inlined_call_operand.vmem [shape: f32[2,1,128], index: 19, kind: input, shape index: {}]
  %s20 = inlined_call_operand.vmem [shape: f32[128,128], index: 20, kind: input, shape index: {}]
  %s21 = inlined_call_operand.vmem [shape: f32[1,128], index: 21, kind: input, shape index: {}]
  %s22 = inlined_call_operand.vmem [shape: f32[2,2,128], index: 22, kind: output, shape index: {}]
  %s23 = sld [smem:[#allocation0]]
  $region129: #{bert_model_forward.1} parent=0
    _
  %s25 = ssub.s32 1, %s23
  %s26 = scalar_select 0, %s25, %s23
  loop: start=0, step=1, limit=6
  $region2: #{bert_model_forward.1} parent=0 // loop_pre_header
    _
  $region3: #{bert_model_forward.1} parent=0 // loop_header
    %s28 = sphi 0, %s32
    %p29 = scmp.ge.s32.totalorder %s28, 6
    %s35 = sphi 0, %s47
    %s36 = sphi 0, %s43
    %s37 = sphi 0, %s35
    %s38 = sphi 0, %s36
    %s39 = sphi 0, %s37
    %s40 = sphi 0, %s38
    %s50 = sphi 0, %s52
    %s53 = sphi 0, %s50
    %s54 = sphi 0, %s53
    %s70 = sphi 0, %s54
    %s76 = sphi 0, %s78
    %s79 = sphi 0, %s76
    %s80 = sphi 0, %s79
    %s96 = sphi 0, %s80
    %s100 = sphi 0, %s100
    %s102 = sphi 0, %s100
    %s103 = sphi 0, %s102
    %s117 = sphi 0, %s103
    %s121 = sphi 0, %s121
    %s123 = sphi 0, %s121
    %s124 = sphi 0, %s123
    %s138 = sphi 0, %s124
    %s144 = sphi 0, %s146
    %s147 = sphi 0, %s144
    %s148 = sphi 0, %s147
    %s164 = sphi 0, %s148
    %s170 = sphi 0, %s172
    %s173 = sphi 0, %s170
    %s174 = sphi 0, %s173
    %s190 = sphi 0, %s174
    %s196 = sphi 0, %s198
    %s199 = sphi 0, %s196
    %s200 = sphi 0, %s199
    %s216 = sphi 0, %s200
    %s222 = sphi 0, %s224
    %s225 = sphi 0, %s222
    %s226 = sphi 0, %s225
    %s242 = sphi 0, %s226
    %s248 = sphi 0, %s250
    %s251 = sphi 0, %s248
    %s252 = sphi 0, %s251
    %s268 = sphi 0, %s252
    %s274 = sphi 0, %s276
    %s277 = sphi 0, %s274
    %s278 = sphi 0, %s277
    %s294 = sphi 0, %s278
    %s300 = sphi 0, %s302
    %s303 = sphi 0, %s300
    %s304 = sphi 0, %s303
    %s320 = sphi 0, %s304
    %s326 = sphi 0, %s328
    %s329 = sphi 0, %s326
    %s330 = sphi 0, %s329
    %s346 = sphi 0, %s330
    %s352 = sphi 0, %s354
    %s355 = sphi 0, %s352
    %s356 = sphi 0, %s355
    %s372 = sphi 0, %s356
    %s378 = sphi 0, %s380
    %s381 = sphi 0, %s378
    %s382 = sphi 0, %s381
    %s398 = sphi 0, %s382
    %s404 = sphi 0, %s406
    %s407 = sphi 0, %s404
    %s408 = sphi 0, %s407
    %s424 = sphi 0, %s408
    %s430 = sphi 0, %s432
    %s433 = sphi 0, %s430
    %s434 = sphi 0, %s433
    %s450 = sphi 0, %s434
    %s456 = sphi 0, %s458
    %s459 = sphi 0, %s456
    %s460 = sphi 0, %s459
    %s476 = sphi 0, %s460
    %s482 = sphi 0, %s484
    %s485 = sphi 0, %s482
    %s486 = sphi 0, %s485
    %s502 = sphi 0, %s486
    %s508 = sphi 0, %s510
    %s511 = sphi 0, %s508
    %s512 = sphi 0, %s511
    %s528 = sphi 0, %s512
    %s534 = sphi 0, %s536
    %s537 = sphi 0, %s534
    %s538 = sphi 0, %s537
    %s554 = sphi 0, %s538
    %s558 = sphi 0, %s558
    %s560 = sphi 0, %s558
    %s561 = sphi 0, %s560
    %s575 = sphi 0, %s561
    %s579 = sphi 0, %s579
    %s581 = sphi 0, %s579
    %s582 = sphi 0, %s581
    %s596 = sphi 0, %s582
    %s602 = sphi 0, %s604
    %s605 = sphi 0, %s602
    %s606 = sphi 0, %s605
    %s622 = sphi 0, %s606
  $region4: #{bert_model_forward.1} parent=0 // loop_header_branch
    %31 = sbr.rel (%p29) target = $region8
  $region5: #{bert_model_forward.1} parent=0 // loop_body
    %s33 = ssub.s32 %s28, 1
    %s34 = ssub.s32 %s28, 2
    %s41 = sadd.s32 1, %s36
    %p42 = scmp.ge.s32.totalorder %s41, 2
    %s43 = scalar_select %p42, 0, %s41
    %s44 = sadd.s32 1, %s35
    %s45 = scalar_select %p42, %s44, %s35
    %p46 = scmp.ge.s32.totalorder %s45, 2
    %s47 = scalar_select %p46, 0, %s45
    %s48 = ssub.s32 %s35, %s47
    %p49 = scmp.eq.s32.totalorder %s48, 0
    %s51 = sadd.s32 %s50, 1
    %s52 = scalar_select %p49, %s50, %s51
    %p55 = pneg %p49
    %p56 = scmp.eq.s32.totalorder %s28, 3
    %p57 = por %p55, %p56
    %p58 = scmp.ne.s32.totalorder %s50, %s53
    %p59 = scmp.eq.s32.totalorder %s28, 0
    %p60 = por %p58, %p59
    %p61 = scmp.ne.s32.totalorder %s50, %s53
    %p62 = scmp.eq.s32.totalorder %s33, 3
    %p63 = por %p61, %p62
    %p64 = scmp.ne.s32.totalorder %s53, %s54
    %p65 = scmp.eq.s32.totalorder %s33, 0
    %p66 = por %p64, %p65
    %p67 = scmp.ne.s32.totalorder %s53, %s54
    %p68 = scmp.eq.s32.totalorder %s34, 3
    %p69 = por %p67, %p68
    %p71 = scmp.ne.s32.totalorder %s54, %s70
    %p72 = scmp.eq.s32.totalorder %s34, 0
    %p73 = por %p71, %p72
    %s74 = ssub.s32 %s35, %s47
    %p75 = scmp.eq.s32.totalorder %s74, 0
    %s77 = sadd.s32 %s76, 1
    %s78 = scalar_select %p75, %s76, %s77
    %p81 = pneg %p75
    %p82 = scmp.eq.s32.totalorder %s28, 3
    %p83 = por %p81, %p82
    %p84 = scmp.ne.s32.totalorder %s76, %s79
    %p85 = scmp.eq.s32.totalorder %s28, 0
    %p86 = por %p84, %p85
    %p87 = scmp.ne.s32.totalorder %s76, %s79
    %p88 = scmp.eq.s32.totalorder %s33, 3
    %p89 = por %p87, %p88
    %p90 = scmp.ne.s32.totalorder %s79, %s80
    %p91 = scmp.eq.s32.totalorder %s33, 0
    %p92 = por %p90, %p91
    %p93 = scmp.ne.s32.totalorder %s79, %s80
    %p94 = scmp.eq.s32.totalorder %s34, 3
    %p95 = por %p93, %p94
    %p97 = scmp.ne.s32.totalorder %s80, %s96
    %p98 = scmp.eq.s32.totalorder %s34, 0
    %p99 = por %p97, %p98
    %s101 = sadd.s32 %s100, 1
    %p104 = scmp.eq.s32.totalorder %s28, 3
    %p105 = scmp.ne.s32.totalorder %s100, %s102
    %p106 = scmp.eq.s32.totalorder %s28, 0
    %p107 = por %p105, %p106
    %p108 = scmp.ne.s32.totalorder %s100, %s102
    %p109 = scmp.eq.s32.totalorder %s33, 3
    %p110 = por %p108, %p109
    %p111 = scmp.ne.s32.totalorder %s102, %s103
    %p112 = scmp.eq.s32.totalorder %s33, 0
    %p113 = por %p111, %p112
    %p114 = scmp.ne.s32.totalorder %s102, %s103
    %p115 = scmp.eq.s32.totalorder %s34, 3
    %p116 = por %p114, %p115
    %p118 = scmp.ne.s32.totalorder %s103, %s117
    %p119 = scmp.eq.s32.totalorder %s34, 0
    %p120 = por %p118, %p119
    %s122 = sadd.s32 %s121, 1
    %p125 = scmp.eq.s32.totalorder %s28, 3
    %p126 = scmp.ne.s32.totalorder %s121, %s123
    %p127 = scmp.eq.s32.totalorder %s28, 0
    %p128 = por %p126, %p127
    %p129 = scmp.ne.s32.totalorder %s121, %s123
    %p130 = scmp.eq.s32.totalorder %s33, 3
    %p131 = por %p129, %p130
    %p132 = scmp.ne.s32.totalorder %s123, %s124
    %p133 = scmp.eq.s32.totalorder %s33, 0
    %p134 = por %p132, %p133
    %p135 = scmp.ne.s32.totalorder %s123, %s124
    %p136 = scmp.eq.s32.totalorder %s34, 3
    %p137 = por %p135, %p136
    %p139 = scmp.ne.s32.totalorder %s124, %s138
    %p140 = scmp.eq.s32.totalorder %s34, 0
    %p141 = por %p139, %p140
    %s142 = ssub.s32 %s36, %s43
    %p143 = scmp.eq.s32.totalorder %s142, 0
    %s145 = sadd.s32 %s144, 1
    %s146 = scalar_select %p143, %s144, %s145
    %p149 = pneg %p143
    %p150 = scmp.eq.s32.totalorder %s28, 3
    %p151 = por %p149, %p150
    %p152 = scmp.ne.s32.totalorder %s144, %s147
    %p153 = scmp.eq.s32.totalorder %s28, 0
    %p154 = por %p152, %p153
    %p155 = scmp.ne.s32.totalorder %s144, %s147
    %p156 = scmp.eq.s32.totalorder %s33, 3
    %p157 = por %p155, %p156
    %p158 = scmp.ne.s32.totalorder %s147, %s148
    %p159 = scmp.eq.s32.totalorder %s33, 0
    %p160 = por %p158, %p159
    %p161 = scmp.ne.s32.totalorder %s147, %s148
    %p162 = scmp.eq.s32.totalorder %s34, 3
    %p163 = por %p161, %p162
    %p165 = scmp.ne.s32.totalorder %s148, %s164
    %p166 = scmp.eq.s32.totalorder %s34, 0
    %p167 = por %p165, %p166
    %s168 = ssub.s32 %s36, %s43
    %p169 = scmp.eq.s32.totalorder %s168, 0
    %s171 = sadd.s32 %s170, 1
    %s172 = scalar_select %p169, %s170, %s171
    %p175 = pneg %p169
    %p176 = scmp.eq.s32.totalorder %s28, 3
    %p177 = por %p175, %p176
    %p178 = scmp.ne.s32.totalorder %s170, %s173
    %p179 = scmp.eq.s32.totalorder %s28, 0
    %p180 = por %p178, %p179
    %p181 = scmp.ne.s32.totalorder %s170, %s173
    %p182 = scmp.eq.s32.totalorder %s33, 3
    %p183 = por %p181, %p182
    %p184 = scmp.ne.s32.totalorder %s173, %s174
    %p185 = scmp.eq.s32.totalorder %s33, 0
    %p186 = por %p184, %p185
    %p187 = scmp.ne.s32.totalorder %s173, %s174
    %p188 = scmp.eq.s32.totalorder %s34, 3
    %p189 = por %p187, %p188
    %p191 = scmp.ne.s32.totalorder %s174, %s190
    %p192 = scmp.eq.s32.totalorder %s34, 0
    %p193 = por %p191, %p192
    %s194 = ssub.s32 %s36, %s43
    %p195 = scmp.eq.s32.totalorder %s194, 0
    %s197 = sadd.s32 %s196, 1
    %s198 = scalar_select %p195, %s196, %s197
    %p201 = pneg %p195
    %p202 = scmp.eq.s32.totalorder %s28, 3
    %p203 = por %p201, %p202
    %p204 = scmp.ne.s32.totalorder %s196, %s199
    %p205 = scmp.eq.s32.totalorder %s28, 0
    %p206 = por %p204, %p205
    %p207 = scmp.ne.s32.totalorder %s196, %s199
    %p208 = scmp.eq.s32.totalorder %s33, 3
    %p209 = por %p207, %p208
    %p210 = scmp.ne.s32.totalorder %s199, %s200
    %p211 = scmp.eq.s32.totalorder %s33, 0
    %p212 = por %p210, %p211
    %p213 = scmp.ne.s32.totalorder %s199, %s200
    %p214 = scmp.eq.s32.totalorder %s34, 3
    %p215 = por %p213, %p214
    %p217 = scmp.ne.s32.totalorder %s200, %s216
    %p218 = scmp.eq.s32.totalorder %s34, 0
    %p219 = por %p217, %p218
    %s220 = ssub.s32 %s36, %s43
    %p221 = scmp.eq.s32.totalorder %s220, 0
    %s223 = sadd.s32 %s222, 1
    %s224 = scalar_select %p221, %s222, %s223
    %p227 = pneg %p221
    %p228 = scmp.eq.s32.totalorder %s28, 3
    %p229 = por %p227, %p228
    %p230 = scmp.ne.s32.totalorder %s222, %s225
    %p231 = scmp.eq.s32.totalorder %s28, 0
    %p232 = por %p230, %p231
    %p233 = scmp.ne.s32.totalorder %s222, %s225
    %p234 = scmp.eq.s32.totalorder %s33, 3
    %p235 = por %p233, %p234
    %p236 = scmp.ne.s32.totalorder %s225, %s226
    %p237 = scmp.eq.s32.totalorder %s33, 0
    %p238 = por %p236, %p237
    %p239 = scmp.ne.s32.totalorder %s225, %s226
    %p240 = scmp.eq.s32.totalorder %s34, 3
    %p241 = por %p239, %p240
    %p243 = scmp.ne.s32.totalorder %s226, %s242
    %p244 = scmp.eq.s32.totalorder %s34, 0
    %p245 = por %p243, %p244
    %s246 = ssub.s32 %s36, %s43
    %p247 = scmp.eq.s32.totalorder %s246, 0
    %s249 = sadd.s32 %s248, 1
    %s250 = scalar_select %p247, %s248, %s249
    %p253 = pneg %p247
    %p254 = scmp.eq.s32.totalorder %s28, 3
    %p255 = por %p253, %p254
    %p256 = scmp.ne.s32.totalorder %s248, %s251
    %p257 = scmp.eq.s32.totalorder %s28, 0
    %p258 = por %p256, %p257
    %p259 = scmp.ne.s32.totalorder %s248, %s251
    %p260 = scmp.eq.s32.totalorder %s33, 3
    %p261 = por %p259, %p260
    %p262 = scmp.ne.s32.totalorder %s251, %s252
    %p263 = scmp.eq.s32.totalorder %s33, 0
    %p264 = por %p262, %p263
    %p265 = scmp.ne.s32.totalorder %s251, %s252
    %p266 = scmp.eq.s32.totalorder %s34, 3
    %p267 = por %p265, %p266
    %p269 = scmp.ne.s32.totalorder %s252, %s268
    %p270 = scmp.eq.s32.totalorder %s34, 0
    %p271 = por %p269, %p270
    %s272 = ssub.s32 %s36, %s43
    %p273 = scmp.eq.s32.totalorder %s272, 0
    %s275 = sadd.s32 %s274, 1
    %s276 = scalar_select %p273, %s274, %s275
    %p279 = pneg %p273
    %p280 = scmp.eq.s32.totalorder %s28, 3
    %p281 = por %p279, %p280
    %p282 = scmp.ne.s32.totalorder %s274, %s277
    %p283 = scmp.eq.s32.totalorder %s28, 0
    %p284 = por %p282, %p283
    %p285 = scmp.ne.s32.totalorder %s274, %s277
    %p286 = scmp.eq.s32.totalorder %s33, 3
    %p287 = por %p285, %p286
    %p288 = scmp.ne.s32.totalorder %s277, %s278
    %p289 = scmp.eq.s32.totalorder %s33, 0
    %p290 = por %p288, %p289
    %p291 = scmp.ne.s32.totalorder %s277, %s278
    %p292 = scmp.eq.s32.totalorder %s34, 3
    %p293 = por %p291, %p292
    %p295 = scmp.ne.s32.totalorder %s278, %s294
    %p296 = scmp.eq.s32.totalorder %s34, 0
    %p297 = por %p295, %p296
    %s298 = ssub.s32 %s36, %s43
    %p299 = scmp.eq.s32.totalorder %s298, 0
    %s301 = sadd.s32 %s300, 1
    %s302 = scalar_select %p299, %s300, %s301
    %p305 = pneg %p299
    %p306 = scmp.eq.s32.totalorder %s28, 3
    %p307 = por %p305, %p306
    %p308 = scmp.ne.s32.totalorder %s300, %s303
    %p309 = scmp.eq.s32.totalorder %s28, 0
    %p310 = por %p308, %p309
    %p311 = scmp.ne.s32.totalorder %s300, %s303
    %p312 = scmp.eq.s32.totalorder %s33, 3
    %p313 = por %p311, %p312
    %p314 = scmp.ne.s32.totalorder %s303, %s304
    %p315 = scmp.eq.s32.totalorder %s33, 0
    %p316 = por %p314, %p315
    %p317 = scmp.ne.s32.totalorder %s303, %s304
    %p318 = scmp.eq.s32.totalorder %s34, 3
    %p319 = por %p317, %p318
    %p321 = scmp.ne.s32.totalorder %s304, %s320
    %p322 = scmp.eq.s32.totalorder %s34, 0
    %p323 = por %p321, %p322
    %s324 = ssub.s32 %s36, %s43
    %p325 = scmp.eq.s32.totalorder %s324, 0
    %s327 = sadd.s32 %s326, 1
    %s328 = scalar_select %p325, %s326, %s327
    %p331 = pneg %p325
    %p332 = scmp.eq.s32.totalorder %s28, 3
    %p333 = por %p331, %p332
    %p334 = scmp.ne.s32.totalorder %s326, %s329
    %p335 = scmp.eq.s32.totalorder %s28, 0
    %p336 = por %p334, %p335
    %p337 = scmp.ne.s32.totalorder %s326, %s329
    %p338 = scmp.eq.s32.totalorder %s33, 3
    %p339 = por %p337, %p338
    %p340 = scmp.ne.s32.totalorder %s329, %s330
    %p341 = scmp.eq.s32.totalorder %s33, 0
    %p342 = por %p340, %p341
    %p343 = scmp.ne.s32.totalorder %s329, %s330
    %p344 = scmp.eq.s32.totalorder %s34, 3
    %p345 = por %p343, %p344
    %p347 = scmp.ne.s32.totalorder %s330, %s346
    %p348 = scmp.eq.s32.totalorder %s34, 0
    %p349 = por %p347, %p348
    %s350 = ssub.s32 %s36, %s43
    %p351 = scmp.eq.s32.totalorder %s350, 0
    %s353 = sadd.s32 %s352, 1
    %s354 = scalar_select %p351, %s352, %s353
    %p357 = pneg %p351
    %p358 = scmp.eq.s32.totalorder %s28, 3
    %p359 = por %p357, %p358
    %p360 = scmp.ne.s32.totalorder %s352, %s355
    %p361 = scmp.eq.s32.totalorder %s28, 0
    %p362 = por %p360, %p361
    %p363 = scmp.ne.s32.totalorder %s352, %s355
    %p364 = scmp.eq.s32.totalorder %s33, 3
    %p365 = por %p363, %p364
    %p366 = scmp.ne.s32.totalorder %s355, %s356
    %p367 = scmp.eq.s32.totalorder %s33, 0
    %p368 = por %p366, %p367
    %p369 = scmp.ne.s32.totalorder %s355, %s356
    %p370 = scmp.eq.s32.totalorder %s34, 3
    %p371 = por %p369, %p370
    %p373 = scmp.ne.s32.totalorder %s356, %s372
    %p374 = scmp.eq.s32.totalorder %s34, 0
    %p375 = por %p373, %p374
    %s376 = ssub.s32 %s36, %s43
    %p377 = scmp.eq.s32.totalorder %s376, 0
    %s379 = sadd.s32 %s378, 1
    %s380 = scalar_select %p377, %s378, %s379
    %p383 = pneg %p377
    %p384 = scmp.eq.s32.totalorder %s28, 3
    %p385 = por %p383, %p384
    %p386 = scmp.ne.s32.totalorder %s378, %s381
    %p387 = scmp.eq.s32.totalorder %s28, 0
    %p388 = por %p386, %p387
    %p389 = scmp.ne.s32.totalorder %s378, %s381
    %p390 = scmp.eq.s32.totalorder %s33, 3
    %p391 = por %p389, %p390
    %p392 = scmp.ne.s32.totalorder %s381, %s382
    %p393 = scmp.eq.s32.totalorder %s33, 0
    %p394 = por %p392, %p393
    %p395 = scmp.ne.s32.totalorder %s381, %s382
    %p396 = scmp.eq.s32.totalorder %s34, 3
    %p397 = por %p395, %p396
    %p399 = scmp.ne.s32.totalorder %s382, %s398
    %p400 = scmp.eq.s32.totalorder %s34, 0
    %p401 = por %p399, %p400
    %s402 = ssub.s32 %s36, %s43
    %p403 = scmp.eq.s32.totalorder %s402, 0
    %s405 = sadd.s32 %s404, 1
    %s406 = scalar_select %p403, %s404, %s405
    %p409 = pneg %p403
    %p410 = scmp.eq.s32.totalorder %s28, 3
    %p411 = por %p409, %p410
    %p412 = scmp.ne.s32.totalorder %s404, %s407
    %p413 = scmp.eq.s32.totalorder %s28, 0
    %p414 = por %p412, %p413
    %p415 = scmp.ne.s32.totalorder %s404, %s407
    %p416 = scmp.eq.s32.totalorder %s33, 3
    %p417 = por %p415, %p416
    %p418 = scmp.ne.s32.totalorder %s407, %s408
    %p419 = scmp.eq.s32.totalorder %s33, 0
    %p420 = por %p418, %p419
    %p421 = scmp.ne.s32.totalorder %s407, %s408
    %p422 = scmp.eq.s32.totalorder %s34, 3
    %p423 = por %p421, %p422
    %p425 = scmp.ne.s32.totalorder %s408, %s424
    %p426 = scmp.eq.s32.totalorder %s34, 0
    %p427 = por %p425, %p426
    %s428 = ssub.s32 %s36, %s43
    %p429 = scmp.eq.s32.totalorder %s428, 0
    %s431 = sadd.s32 %s430, 1
    %s432 = scalar_select %p429, %s430, %s431
    %p435 = pneg %p429
    %p436 = scmp.eq.s32.totalorder %s28, 3
    %p437 = por %p435, %p436
    %p438 = scmp.ne.s32.totalorder %s430, %s433
    %p439 = scmp.eq.s32.totalorder %s28, 0
    %p440 = por %p438, %p439
    %p441 = scmp.ne.s32.totalorder %s430, %s433
    %p442 = scmp.eq.s32.totalorder %s33, 3
    %p443 = por %p441, %p442
    %p444 = scmp.ne.s32.totalorder %s433, %s434
    %p445 = scmp.eq.s32.totalorder %s33, 0
    %p446 = por %p444, %p445
    %p447 = scmp.ne.s32.totalorder %s433, %s434
    %p448 = scmp.eq.s32.totalorder %s34, 3
    %p449 = por %p447, %p448
    %p451 = scmp.ne.s32.totalorder %s434, %s450
    %p452 = scmp.eq.s32.totalorder %s34, 0
    %p453 = por %p451, %p452
    %s454 = ssub.s32 %s36, %s43
    %p455 = scmp.eq.s32.totalorder %s454, 0
    %s457 = sadd.s32 %s456, 1
    %s458 = scalar_select %p455, %s456, %s457
    %p461 = pneg %p455
    %p462 = scmp.eq.s32.totalorder %s28, 3
    %p463 = por %p461, %p462
    %p464 = scmp.ne.s32.totalorder %s456, %s459
    %p465 = scmp.eq.s32.totalorder %s28, 0
    %p466 = por %p464, %p465
    %p467 = scmp.ne.s32.totalorder %s456, %s459
    %p468 = scmp.eq.s32.totalorder %s33, 3
    %p469 = por %p467, %p468
    %p470 = scmp.ne.s32.totalorder %s459, %s460
    %p471 = scmp.eq.s32.totalorder %s33, 0
    %p472 = por %p470, %p471
    %p473 = scmp.ne.s32.totalorder %s459, %s460
    %p474 = scmp.eq.s32.totalorder %s34, 3
    %p475 = por %p473, %p474
    %p477 = scmp.ne.s32.totalorder %s460, %s476
    %p478 = scmp.eq.s32.totalorder %s34, 0
    %p479 = por %p477, %p478
    %s480 = ssub.s32 %s36, %s43
    %p481 = scmp.eq.s32.totalorder %s480, 0
    %s483 = sadd.s32 %s482, 1
    %s484 = scalar_select %p481, %s482, %s483
    %p487 = pneg %p481
    %p488 = scmp.eq.s32.totalorder %s28, 3
    %p489 = por %p487, %p488
    %p490 = scmp.ne.s32.totalorder %s482, %s485
    %p491 = scmp.eq.s32.totalorder %s28, 0
    %p492 = por %p490, %p491
    %p493 = scmp.ne.s32.totalorder %s482, %s485
    %p494 = scmp.eq.s32.totalorder %s33, 3
    %p495 = por %p493, %p494
    %p496 = scmp.ne.s32.totalorder %s485, %s486
    %p497 = scmp.eq.s32.totalorder %s33, 0
    %p498 = por %p496, %p497
    %p499 = scmp.ne.s32.totalorder %s485, %s486
    %p500 = scmp.eq.s32.totalorder %s34, 3
    %p501 = por %p499, %p500
    %p503 = scmp.ne.s32.totalorder %s486, %s502
    %p504 = scmp.eq.s32.totalorder %s34, 0
    %p505 = por %p503, %p504
    %s506 = ssub.s32 %s36, %s43
    %p507 = scmp.eq.s32.totalorder %s506, 0
    %s509 = sadd.s32 %s508, 1
    %s510 = scalar_select %p507, %s508, %s509
    %p513 = pneg %p507
    %p514 = scmp.eq.s32.totalorder %s28, 3
    %p515 = por %p513, %p514
    %p516 = scmp.ne.s32.totalorder %s508, %s511
    %p517 = scmp.eq.s32.totalorder %s28, 0
    %p518 = por %p516, %p517
    %p519 = scmp.ne.s32.totalorder %s508, %s511
    %p520 = scmp.eq.s32.totalorder %s33, 3
    %p521 = por %p519, %p520
    %p522 = scmp.ne.s32.totalorder %s511, %s512
    %p523 = scmp.eq.s32.totalorder %s33, 0
    %p524 = por %p522, %p523
    %p525 = scmp.ne.s32.totalorder %s511, %s512
    %p526 = scmp.eq.s32.totalorder %s34, 3
    %p527 = por %p525, %p526
    %p529 = scmp.ne.s32.totalorder %s512, %s528
    %p530 = scmp.eq.s32.totalorder %s34, 0
    %p531 = por %p529, %p530
    %s532 = ssub.s32 %s36, %s43
    %p533 = scmp.eq.s32.totalorder %s532, 0
    %s535 = sadd.s32 %s534, 1
    %s536 = scalar_select %p533, %s534, %s535
    %p539 = pneg %p533
    %p540 = scmp.eq.s32.totalorder %s28, 3
    %p541 = por %p539, %p540
    %p542 = scmp.ne.s32.totalorder %s534, %s537
    %p543 = scmp.eq.s32.totalorder %s28, 0
    %p544 = por %p542, %p543
    %p545 = scmp.ne.s32.totalorder %s534, %s537
    %p546 = scmp.eq.s32.totalorder %s33, 3
    %p547 = por %p545, %p546
    %p548 = scmp.ne.s32.totalorder %s537, %s538
    %p549 = scmp.eq.s32.totalorder %s33, 0
    %p550 = por %p548, %p549
    %p551 = scmp.ne.s32.totalorder %s537, %s538
    %p552 = scmp.eq.s32.totalorder %s34, 3
    %p553 = por %p551, %p552
    %p555 = scmp.ne.s32.totalorder %s538, %s554
    %p556 = scmp.eq.s32.totalorder %s34, 0
    %p557 = por %p555, %p556
    %s559 = sadd.s32 %s558, 1
    %p562 = scmp.eq.s32.totalorder %s28, 3
    %p563 = scmp.ne.s32.totalorder %s558, %s560
    %p564 = scmp.eq.s32.totalorder %s28, 0
    %p565 = por %p563, %p564
    %p566 = scmp.ne.s32.totalorder %s558, %s560
    %p567 = scmp.eq.s32.totalorder %s33, 3
    %p568 = por %p566, %p567
    %p569 = scmp.ne.s32.totalorder %s560, %s561
    %p570 = scmp.eq.s32.totalorder %s33, 0
    %p571 = por %p569, %p570
    %p572 = scmp.ne.s32.totalorder %s560, %s561
    %p573 = scmp.eq.s32.totalorder %s34, 3
    %p574 = por %p572, %p573
    %p576 = scmp.ne.s32.totalorder %s561, %s575
    %p577 = scmp.eq.s32.totalorder %s34, 0
    %p578 = por %p576, %p577
    %s580 = sadd.s32 %s579, 1
    %p583 = scmp.eq.s32.totalorder %s28, 3
    %p584 = scmp.ne.s32.totalorder %s579, %s581
    %p585 = scmp.eq.s32.totalorder %s28, 0
    %p586 = por %p584, %p585
    %p587 = scmp.ne.s32.totalorder %s579, %s581
    %p588 = scmp.eq.s32.totalorder %s33, 3
    %p589 = por %p587, %p588
    %p590 = scmp.ne.s32.totalorder %s581, %s582
    %p591 = scmp.eq.s32.totalorder %s33, 0
    %p592 = por %p590, %p591
    %p593 = scmp.ne.s32.totalorder %s581, %s582
    %p594 = scmp.eq.s32.totalorder %s34, 3
    %p595 = por %p593, %p594
    %p597 = scmp.ne.s32.totalorder %s582, %s596
    %p598 = scmp.eq.s32.totalorder %s34, 0
    %p599 = por %p597, %p598
    %s600 = ssub.s32 %s35, %s47
    %p601 = scmp.eq.s32.totalorder %s600, 0
    %s603 = sadd.s32 %s602, 1
    %s604 = scalar_select %p601, %s602, %s603
    %p607 = pneg %p601
    %p608 = scmp.eq.s32.totalorder %s28, 3
    %p609 = por %p607, %p608
    %p610 = scmp.ne.s32.totalorder %s602, %s605
    %p611 = scmp.eq.s32.totalorder %s28, 0
    %p612 = por %p610, %p611
    %p613 = scmp.ne.s32.totalorder %s602, %s605
    %p614 = scmp.eq.s32.totalorder %s33, 3
    %p615 = por %p613, %p614
    %p616 = scmp.ne.s32.totalorder %s605, %s606
    %p617 = scmp.eq.s32.totalorder %s33, 0
    %p618 = por %p616, %p617
    %p619 = scmp.ne.s32.totalorder %s605, %s606
    %p620 = scmp.eq.s32.totalorder %s34, 3
    %p621 = por %p619, %p620
    %p623 = scmp.ne.s32.totalorder %s606, %s622
    %p624 = scmp.eq.s32.totalorder %s34, 0
    %p625 = por %p623, %p624
    %p626 = scmp.le.s32.totalorder 1, %s28
    %p627 = scmp.lt.s32.totalorder %s28, 5
    %p628 = pnand %p626, %p627
    %p629 = pneg %p628
    // Predicated region
    $region9: #{bert_model_forward.1} parent=5 // pred_check
      _
    $region10: #{bert_model_forward.1} parent=5 // pred_check_branch
      %631 = sbr.rel (%p628) target = $region12
    $region11: #{bert_model_forward.1} parent=5 // pred_region
      %s632 = ssub.s32 %s28, 1
      // Predicated region
      $region13: #{bert_model_forward.1} parent=11 // pred_check
        %p633 = pneg %p113
      $region14: #{bert_model_forward.1} parent=11 // pred_check_branch
        %635 = sbr.rel (%p633) target = $region16
      $region15: #{bert_model_forward.1} parent=11 // pred_region
        _
      $region16: #{bert_model_forward.1} parent=11 // pred_fallthru
        _
      // Predicated region
      $region17: #{bert_model_forward.1} parent=11 // pred_check
        %p636 = pneg %p134
      $region18: #{bert_model_forward.1} parent=11 // pred_check_branch
        %638 = sbr.rel (%p636) target = $region20
      $region19: #{bert_model_forward.1} parent=11 // pred_region
        _
      $region20: #{bert_model_forward.1} parent=11 // pred_fallthru
        _
      // Predicated region
      $region21: #{bert_model_forward.1} parent=11 // pred_check
        %p639 = pneg %p571
      $region22: #{bert_model_forward.1} parent=11 // pred_check_branch
        %641 = sbr.rel (%p639) target = $region24
      $region23: #{bert_model_forward.1} parent=11 // pred_region
        _
      $region24: #{bert_model_forward.1} parent=11 // pred_fallthru
        _
      // Predicated region
      $region25: #{bert_model_forward.1} parent=11 // pred_check
        %p642 = pneg %p592
      $region26: #{bert_model_forward.1} parent=11 // pred_check_branch
        %644 = sbr.rel (%p642) target = $region28
      $region27: #{bert_model_forward.1} parent=11 // pred_region
        _
      $region28: #{bert_model_forward.1} parent=11 // pred_fallthru
        _
    $region12: #{bert_model_forward.1} parent=5 // pred_fallthru
      _
    %p645 = scmp.lt.s32.totalorder %s28, 4
    // Predicated region
    $region29: #{bert_model_forward.1} parent=5 // pred_check
      %p646 = pneg %p645
    $region30: #{bert_model_forward.1} parent=5 // pred_check_branch
      %648 = sbr.rel (%p646) target = $region32
    $region31: #{bert_model_forward.1} parent=5 // pred_region
      // Predicated region
      $region33: #{bert_model_forward.1} parent=31 // pred_check
        %p649 = pneg %p60
      $region34: #{bert_model_forward.1} parent=31 // pred_check_branch
        %651 = sbr.rel (%p649) target = $region36
      $region35: #{bert_model_forward.1} parent=31 // pred_region
        %s652 = smul.u32 2, %s35
        %p653 = scmp.lt.s32.totalorder %s652, 3
        %s654 = scalar_select %p653, %s652, 3
        %s655 = smul.addr %s654, 8
        %s656 = scalar_lea.vmem %s0, %s655
        %s657 = smul.u32 2, %s35
      $region36: #{bert_model_forward.1} parent=31 // pred_fallthru
        _
      // Predicated region
      $region37: #{bert_model_forward.1} parent=31 // pred_check
        %p658 = pneg %p86
      $region38: #{bert_model_forward.1} parent=31 // pred_check_branch
        %660 = sbr.rel (%p658) target = $region40
      $region39: #{bert_model_forward.1} parent=31 // pred_region
        %s661 = smul.u32 4, %s35
        %p662 = scmp.lt.s32.totalorder %s661, 7
        %s663 = scalar_select %p662, %s661, 7
        %s664 = scalar_lea.vmem %s1, %s663
        %s665 = smul.u32 4, %s35
      $region40: #{bert_model_forward.1} parent=31 // pred_fallthru
        _
      // Predicated region
      $region41: #{bert_model_forward.1} parent=31 // pred_check
        %p666 = pneg %p154
      $region42: #{bert_model_forward.1} parent=31 // pred_check_branch
        %668 = sbr.rel (%p666) target = $region44
      $region43: #{bert_model_forward.1} parent=31 // pred_region
        %p669 = scmp.lt.s32.totalorder %s36, 1
        %s670 = scalar_select %p669, %s36, 1
        %s671 = smul.addr %s670, 32
        %s672 = smul.addr %s671, 8
        %s673 = scalar_lea.vmem %s4, %s672
      $region44: #{bert_model_forward.1} parent=31 // pred_fallthru
        _
      // Predicated region
      $region45: #{bert_model_forward.1} parent=31 // pred_check
        %p674 = pneg %p180
      $region46: #{bert_model_forward.1} parent=31 // pred_check_branch
        %676 = sbr.rel (%p674) target = $region48
      $region47: #{bert_model_forward.1} parent=31 // pred_region
        %p677 = scmp.lt.s32.totalorder %s36, 1
        %s678 = scalar_select %p677, %s36, 1
        %s679 = smul.addr %s678, 2
        %s680 = scalar_lea.vmem %s5, %s679
      $region48: #{bert_model_forward.1} parent=31 // pred_fallthru
        _
      // Predicated region
      $region49: #{bert_model_forward.1} parent=31 // pred_check
        %p681 = pneg %p206
      $region50: #{bert_model_forward.1} parent=31 // pred_check_branch
        %683 = sbr.rel (%p681) target = $region52
      $region51: #{bert_model_forward.1} parent=31 // pred_region
        %p684 = scmp.lt.s32.totalorder %s36, 1
        %s685 = scalar_select %p684, %s36, 1
        %s686 = smul.addr %s685, 32
        %s687 = smul.addr %s686, 8
        %s688 = scalar_lea.vmem %s6, %s687
      $region52: #{bert_model_forward.1} parent=31 // pred_fallthru
        _
      // Predicated region
      $region53: #{bert_model_forward.1} parent=31 // pred_check
        %p689 = pneg %p232
      $region54: #{bert_model_forward.1} parent=31 // pred_check_branch
        %691 = sbr.rel (%p689) target = $region56
      $region55: #{bert_model_forward.1} parent=31 // pred_region
        %p692 = scmp.lt.s32.totalorder %s36, 1
        %s693 = scalar_select %p692, %s36, 1
        %s694 = smul.addr %s693, 2
        %s695 = scalar_lea.vmem %s7, %s694
      $region56: #{bert_model_forward.1} parent=31 // pred_fallthru
        _
      // Predicated region
      $region57: #{bert_model_forward.1} parent=31 // pred_check
        %p696 = pneg %p258
      $region58: #{bert_model_forward.1} parent=31 // pred_check_branch
        %698 = sbr.rel (%p696) target = $region60
      $region59: #{bert_model_forward.1} parent=31 // pred_region
        %p699 = scmp.lt.s32.totalorder %s36, 1
        %s700 = scalar_select %p699, %s36, 1
        %s701 = smul.addr %s700, 32
        %s702 = smul.addr %s701, 8
        %s703 = scalar_lea.vmem %s8, %s702
      $region60: #{bert_model_forward.1} parent=31 // pred_fallthru
        _
      // Predicated region
      $region61: #{bert_model_forward.1} parent=31 // pred_check
        %p704 = pneg %p284
      $region62: #{bert_model_forward.1} parent=31 // pred_check_branch
        %706 = sbr.rel (%p704) target = $region64
      $region63: #{bert_model_forward.1} parent=31 // pred_region
        %p707 = scmp.lt.s32.totalorder %s36, 1
        %s708 = scalar_select %p707, %s36, 1
        %s709 = smul.addr %s708, 2
        %s710 = scalar_lea.vmem %s9, %s709
      $region64: #{bert_model_forward.1} parent=31 // pred_fallthru
        _
      // Predicated region
      $region65: #{bert_model_forward.1} parent=31 // pred_check
        %p711 = pneg %p310
      $region66: #{bert_model_forward.1} parent=31 // pred_check_branch
        %713 = sbr.rel (%p711) target = $region68
      $region67: #{bert_model_forward.1} parent=31 // pred_region
        %p714 = scmp.lt.s32.totalorder %s36, 1
        %s715 = scalar_select %p714, %s36, 1
        %s716 = smul.addr %s715, 4
        %s717 = smul.addr %s716, 8
        %s718 = scalar_lea.vmem %s10, %s717
      $region68: #{bert_model_forward.1} parent=31 // pred_fallthru
        _
      // Predicated region
      $region69: #{bert_model_forward.1} parent=31 // pred_check
        %p719 = pneg %p336
      $region70: #{bert_model_forward.1} parent=31 // pred_check_branch
        %721 = sbr.rel (%p719) target = $region72
      $region71: #{bert_model_forward.1} parent=31 // pred_region
        %p722 = scmp.lt.s32.totalorder %s36, 1
        %s723 = scalar_select %p722, %s36, 1
        %s724 = scalar_lea.vmem %s11, %s723
      $region72: #{bert_model_forward.1} parent=31 // pred_fallthru
        _
      // Predicated region
      $region73: #{bert_model_forward.1} parent=31 // pred_check
        %p725 = pneg %p362
      $region74: #{bert_model_forward.1} parent=31 // pred_check_branch
        %727 = sbr.rel (%p725) target = $region76
      $region75: #{bert_model_forward.1} parent=31 // pred_region
        %p728 = scmp.lt.s32.totalorder %s36, 1
        %s729 = scalar_select %p728, %s36, 1
        %s730 = scalar_lea.vmem %s12, %s729
      $region76: #{bert_model_forward.1} parent=31 // pred_fallthru
        _
      // Predicated region
      $region77: #{bert_model_forward.1} parent=31 // pred_check
        %p731 = pneg %p388
      $region78: #{bert_model_forward.1} parent=31 // pred_check_branch
        %733 = sbr.rel (%p731) target = $region80
      $region79: #{bert_model_forward.1} parent=31 // pred_region
        %p734 = scmp.lt.s32.totalorder %s36, 1
        %s735 = scalar_select %p734, %s36, 1
        %s736 = scalar_lea.vmem %s13, %s735
      $region80: #{bert_model_forward.1} parent=31 // pred_fallthru
        _
      // Predicated region
      $region81: #{bert_model_forward.1} parent=31 // pred_check
        %p737 = pneg %p414
      $region82: #{bert_model_forward.1} parent=31 // pred_check_branch
        %739 = sbr.rel (%p737) target = $region84
      $region83: #{bert_model_forward.1} parent=31 // pred_region
        %p740 = scmp.lt.s32.totalorder %s36, 1
        %s741 = scalar_select %p740, %s36, 1
        %s742 = smul.addr %s741, 16
        %s743 = smul.addr %s742, 8
        %s744 = scalar_lea.vmem %s14, %s743
      $region84: #{bert_model_forward.1} parent=31 // pred_fallthru
        _
      // Predicated region
      $region85: #{bert_model_forward.1} parent=31 // pred_check
        %p745 = pneg %p440
      $region86: #{bert_model_forward.1} parent=31 // pred_check_branch
        %747 = sbr.rel (%p745) target = $region88
      $region87: #{bert_model_forward.1} parent=31 // pred_region
        %p748 = scmp.lt.s32.totalorder %s36, 1
        %s749 = scalar_select %p748, %s36, 1
        %s750 = scalar_lea.vmem %s15, %s749
      $region88: #{bert_model_forward.1} parent=31 // pred_fallthru
        _
      // Predicated region
      $region89: #{bert_model_forward.1} parent=31 // pred_check
        %p751 = pneg %p466
      $region90: #{bert_model_forward.1} parent=31 // pred_check_branch
        %753 = sbr.rel (%p751) target = $region92
      $region91: #{bert_model_forward.1} parent=31 // pred_region
        %p754 = scmp.lt.s32.totalorder %s36, 1
        %s755 = scalar_select %p754, %s36, 1
        %s756 = smul.addr %s755, 16
        %s757 = smul.addr %s756, 8
        %s758 = scalar_lea.vmem %s16, %s757
      $region92: #{bert_model_forward.1} parent=31 // pred_fallthru
        _
      // Predicated region
      $region93: #{bert_model_forward.1} parent=31 // pred_check
        %p759 = pneg %p492
      $region94: #{bert_model_forward.1} parent=31 // pred_check_branch
        %761 = sbr.rel (%p759) target = $region96
      $region95: #{bert_model_forward.1} parent=31 // pred_region
        %p762 = scmp.lt.s32.totalorder %s36, 1
        %s763 = scalar_select %p762, %s36, 1
        %s764 = scalar_lea.vmem %s17, %s763
      $region96: #{bert_model_forward.1} parent=31 // pred_fallthru
        _
      // Predicated region
      $region97: #{bert_model_forward.1} parent=31 // pred_check
        %p765 = pneg %p518
      $region98: #{bert_model_forward.1} parent=31 // pred_check_branch
        %767 = sbr.rel (%p765) target = $region100
      $region99: #{bert_model_forward.1} parent=31 // pred_region
        %p768 = scmp.lt.s32.totalorder %s36, 1
        %s769 = scalar_select %p768, %s36, 1
        %s770 = scalar_lea.vmem %s18, %s769
      $region100: #{bert_model_forward.1} parent=31 // pred_fallthru
        _
      // Predicated region
      $region101: #{bert_model_forward.1} parent=31 // pred_check
        %p771 = pneg %p544
      $region102: #{bert_model_forward.1} parent=31 // pred_check_branch
        %773 = sbr.rel (%p771) target = $region104
      $region103: #{bert_model_forward.1} parent=31 // pred_region
        %p774 = scmp.lt.s32.totalorder %s36, 1
        %s775 = scalar_select %p774, %s36, 1
        %s776 = scalar_lea.vmem %s19, %s775
      $region104: #{bert_model_forward.1} parent=31 // pred_fallthru
        _
    $region32: #{bert_model_forward.1} parent=5 // pred_fallthru
      _
    %p777 = scmp.le.s32.totalorder 1, %s28
    %p778 = scmp.lt.s32.totalorder %s28, 5
    %p779 = pnand %p777, %p778
    %p780 = pneg %p779
    // Predicated region
    $region105: #{bert_model_forward.1} parent=5 // pred_check
      _
    $region106: #{bert_model_forward.1} parent=5 // pred_check_branch
      %782 = sbr.rel (%p779) target = $region108
    $region107: #{bert_model_forward.1} parent=5 // pred_region
      %s783 = ssub.s32 %s28, 1
      %s784 = smul.u32 2, %s37
      %p785 = scmp.lt.s32.totalorder %s784, 3
      %s786 = scalar_select %p785, %s784, 3
      %s787 = smul.addr %s786, 8
      %s788 = scalar_lea.vmem %s0, %s787
      %p789 = pneg %p66
      %p790 = pneg %p63
      %s791 = smul.u32 4, %s37
      %p792 = scmp.lt.s32.totalorder %s791, 7
      %s793 = scalar_select %p792, %s791, 7
      %s794 = scalar_lea.vmem %s1, %s793
      %p795 = pneg %p92
      %p796 = pneg %p89
      %p797 = pneg %p113
      %p798 = pneg %p110
      %p799 = pneg %p134
      %p800 = pneg %p131
      %p801 = scmp.lt.s32.totalorder %s38, 1
      %s802 = scalar_select %p801, %s38, 1
      %s803 = smul.addr %s802, 32
      %s804 = smul.addr %s803, 8
      %s805 = scalar_lea.vmem %s4, %s804
      %p806 = pneg %p160
      %p807 = pneg %p157
      %p808 = scmp.lt.s32.totalorder %s38, 1
      %s809 = scalar_select %p808, %s38, 1
      %s810 = smul.addr %s809, 2
      %s811 = scalar_lea.vmem %s5, %s810
      %p812 = pneg %p186
      %p813 = pneg %p183
      %p814 = scmp.lt.s32.totalorder %s38, 1
      %s815 = scalar_select %p814, %s38, 1
      %s816 = smul.addr %s815, 32
      %s817 = smul.addr %s816, 8
      %s818 = scalar_lea.vmem %s6, %s817
      %p819 = pneg %p212
      %p820 = pneg %p209
      %p821 = scmp.lt.s32.totalorder %s38, 1
      %s822 = scalar_select %p821, %s38, 1
      %s823 = smul.addr %s822, 2
      %s824 = scalar_lea.vmem %s7, %s823
      %p825 = pneg %p238
      %p826 = pneg %p235
      %p827 = scmp.lt.s32.totalorder %s38, 1
      %s828 = scalar_select %p827, %s38, 1
      %s829 = smul.addr %s828, 32
      %s830 = smul.addr %s829, 8
      %s831 = scalar_lea.vmem %s8, %s830
      %p832 = pneg %p264
      %p833 = pneg %p261
      %p834 = scmp.lt.s32.totalorder %s38, 1
      %s835 = scalar_select %p834, %s38, 1
      %s836 = smul.addr %s835, 2
      %s837 = scalar_lea.vmem %s9, %s836
      %p838 = pneg %p290
      %p839 = pneg %p287
      %p840 = scmp.lt.s32.totalorder %s38, 1
      %s841 = scalar_select %p840, %s38, 1
      %s842 = smul.addr %s841, 4
      %s843 = smul.addr %s842, 8
      %s844 = scalar_lea.vmem %s10, %s843
      %p845 = pneg %p316
      %p846 = pneg %p313
      %p847 = scmp.lt.s32.totalorder %s38, 1
      %s848 = scalar_select %p847, %s38, 1
      %s849 = scalar_lea.vmem %s11, %s848
      %p850 = pneg %p342
      %p851 = pneg %p339
      %p852 = scmp.lt.s32.totalorder %s38, 1
      %s853 = scalar_select %p852, %s38, 1
      %s854 = scalar_lea.vmem %s12, %s853
      %p855 = pneg %p368
      %p856 = pneg %p365
      %p857 = scmp.lt.s32.totalorder %s38, 1
      %s858 = scalar_select %p857, %s38, 1
      %s859 = scalar_lea.vmem %s13, %s858
      %p860 = pneg %p394
      %p861 = pneg %p391
      %p862 = scmp.lt.s32.totalorder %s38, 1
      %s863 = scalar_select %p862, %s38, 1
      %s864 = smul.addr %s863, 16
      %s865 = smul.addr %s864, 8
      %s866 = scalar_lea.vmem %s14, %s865
      %p867 = pneg %p420
      %p868 = pneg %p417
      %p869 = scmp.lt.s32.totalorder %s38, 1
      %s870 = scalar_select %p869, %s38, 1
      %s871 = scalar_lea.vmem %s15, %s870
      %p872 = pneg %p446
      %p873 = pneg %p443
      %p874 = scmp.lt.s32.totalorder %s38, 1
      %s875 = scalar_select %p874, %s38, 1
      %s876 = smul.addr %s875, 16
      %s877 = smul.addr %s876, 8
      %s878 = scalar_lea.vmem %s16, %s877
      %p879 = pneg %p472
      %p880 = pneg %p469
      %p881 = scmp.lt.s32.totalorder %s38, 1
      %s882 = scalar_select %p881, %s38, 1
      %s883 = scalar_lea.vmem %s17, %s882
      %p884 = pneg %p498
      %p885 = pneg %p495
      %p886 = scmp.lt.s32.totalorder %s38, 1
      %s887 = scalar_select %p886, %s38, 1
      %s888 = scalar_lea.vmem %s18, %s887
      %p889 = pneg %p524
      %p890 = pneg %p521
      %p891 = scmp.lt.s32.totalorder %s38, 1
      %s892 = scalar_select %p891, %s38, 1
      %s893 = scalar_lea.vmem %s19, %s892
      %p894 = pneg %p550
      %p895 = pneg %p547
      %p896 = pneg %p571
      %p897 = pneg %p568
      %p898 = pneg %p592
      %p899 = pneg %p589
      %p900 = pneg %p618
      %p901 = pneg %p615
      %p902 = scmp.lt.s32.totalorder %s37, 1
      %s903 = scalar_select %p902, %s37, 1
      %s904 = smul.addr %s903, 2
      %s905 = scalar_lea.vmem %s22, %s904
      %s906 = smul.u32 2, %s37
      %p907 = scmp.lt.s32.totalorder %s906, 3
      %s908 = scalar_select %p907, %s906, 3
      %s909 = smul.addr %s908, 8
      %s910 = scalar_lea.vmem %s0, %s909
      %s911 = smul.u32 2, %s37
      %s912 = smul.u32 4, %s37
      %p913 = scmp.lt.s32.totalorder %s912, 7
      %s914 = scalar_select %p913, %s912, 7
      %s915 = scalar_lea.vmem %s1, %s914
      %s916 = smul.u32 4, %s37
      %p917 = scmp.lt.s32.totalorder %s38, 1
      %s918 = scalar_select %p917, %s38, 1
      %s919 = smul.addr %s918, 32
      %s920 = smul.addr %s919, 8
      %s921 = scalar_lea.vmem %s4, %s920
      %p922 = scmp.lt.s32.totalorder %s38, 1
      %s923 = scalar_select %p922, %s38, 1
      %s924 = smul.addr %s923, 2
      %s925 = scalar_lea.vmem %s5, %s924
      %p926 = scmp.lt.s32.totalorder %s38, 1
      %s927 = scalar_select %p926, %s38, 1
      %s928 = smul.addr %s927, 32
      %s929 = smul.addr %s928, 8
      %s930 = scalar_lea.vmem %s6, %s929
      %p931 = scmp.lt.s32.totalorder %s38, 1
      %s932 = scalar_select %p931, %s38, 1
      %s933 = smul.addr %s932, 2
      %s934 = scalar_lea.vmem %s7, %s933
      %p935 = scmp.lt.s32.totalorder %s38, 1
      %s936 = scalar_select %p935, %s38, 1
      %s937 = smul.addr %s936, 32
      %s938 = smul.addr %s937, 8
      %s939 = scalar_lea.vmem %s8, %s938
      %p940 = scmp.lt.s32.totalorder %s38, 1
      %s941 = scalar_select %p940, %s38, 1
      %s942 = smul.addr %s941, 2
      %s943 = scalar_lea.vmem %s9, %s942
      %p944 = scmp.lt.s32.totalorder %s38, 1
      %s945 = scalar_select %p944, %s38, 1
      %s946 = smul.addr %s945, 4
      %s947 = smul.addr %s946, 8
      %s948 = scalar_lea.vmem %s10, %s947
      %p949 = scmp.lt.s32.totalorder %s38, 1
      %s950 = scalar_select %p949, %s38, 1
      %s951 = scalar_lea.vmem %s11, %s950
      %p952 = scmp.lt.s32.totalorder %s38, 1
      %s953 = scalar_select %p952, %s38, 1
      %s954 = scalar_lea.vmem %s12, %s953
      %p955 = scmp.lt.s32.totalorder %s38, 1
      %s956 = scalar_select %p955, %s38, 1
      %s957 = scalar_lea.vmem %s13, %s956
      %p958 = scmp.lt.s32.totalorder %s38, 1
      %s959 = scalar_select %p958, %s38, 1
      %s960 = smul.addr %s959, 16
      %s961 = smul.addr %s960, 8
      %s962 = scalar_lea.vmem %s14, %s961
      %p963 = scmp.lt.s32.totalorder %s38, 1
      %s964 = scalar_select %p963, %s38, 1
      %s965 = scalar_lea.vmem %s15, %s964
      %p966 = scmp.lt.s32.totalorder %s38, 1
      %s967 = scalar_select %p966, %s38, 1
      %s968 = smul.addr %s967, 16
      %s969 = smul.addr %s968, 8
      %s970 = scalar_lea.vmem %s16, %s969
      %p971 = scmp.lt.s32.totalorder %s38, 1
      %s972 = scalar_select %p971, %s38, 1
      %s973 = scalar_lea.vmem %s17, %s972
      %p974 = scmp.lt.s32.totalorder %s38, 1
      %s975 = scalar_select %p974, %s38, 1
      %s976 = scalar_lea.vmem %s18, %s975
      %p977 = scmp.lt.s32.totalorder %s38, 1
      %s978 = scalar_select %p977, %s38, 1
      %s979 = scalar_lea.vmem %s19, %s978
      %p980 = scmp.lt.s32.totalorder %s37, 1
      %s981 = scalar_select %p980, %s37, 1
      %s982 = smul.addr %s981, 2
      %s983 = scalar_lea.vmem %s22, %s982
      %p984 = scmp.eq.s32.totalorder %s38, 0
      // Predicated region
      $region109: #{bert_model_forward.1} parent=107 // pred_check
        %p985 = pneg %p984
      $region110: #{bert_model_forward.1} parent=107 // pred_check_branch
        %987 = sbr.rel (%p985) target = $region112
      $region111: #{bert_model_forward.1} parent=107 // pred_region
        %v988 = vld [vmem:[%s910] sm:$0xff]
        %v989 = vld [vmem:[%s910 + $0x8] sm:$0xff]
        %v990 = vld [vmem:[%s2] sm:$0x1]
        %v991 = vld [vmem:[%s3] sm:$0x1]
        %992 = vadd.xlane.f32.xlu0 %v988
        %v993 = vpop.xlane.xlu0 %992
        %994 = vadd.xlane.f32.xlu0 %v989
        %v995 = vpop.xlane.xlu0 %994
        %v996 = vmul.f32 %v993, 0.03125
        %v997 = vmul.f32 %v995, 0.03125
        %v998 = vmul.f32 %v988, %v988
        %v999 = vmul.f32 %v989, %v989
        %1000 = vadd.xlane.f32.xlu0 %v998
        %v1001 = vpop.xlane.xlu0 %1000
        %1002 = vadd.xlane.f32.xlu0 %v999
        %v1003 = vpop.xlane.xlu0 %1002
        %v1004 = vmul.f32 %v1001, 0.03125
        %v1005 = vmul.f32 %v1003, 0.03125
        %v1006 = vmul.f32 %v996, %v996
        %v1007 = vmul.f32 %v997, %v997
        %v1008 = vsub.f32 %v1004, %v1006
        %v1009 = vsub.f32 %v1005, %v1007
        %v1010 = vmax.f32 %v1008, 0.0
        %v1011 = vmax.f32 %v1009, 0.0
        %v1012 = vsub.f32 %v988, %v996
        %v1013 = vsub.f32 %v989, %v997
        %v1014 = vadd.f32 %v1010, 1e-12
        %v1015 = vadd.f32 %v1011, 1e-12
        %v1016 = vrsqrt.pop %v1014
        %v1017 = vmul.f32 %v1016, %v1014
        %v1018 = vmul.f32 %v1017, %v1016
        %v1019 = vmul.f32 0.5, %v1018
        %v1020 = vsub.f32 1.5, %v1019
        %v1021 = vmul.f32 %v1016, %v1020
        %vm1022 = vweird.f32 %v1014
        %vm1023 = vweird.f32 %v1016
        %vm1024 = vmor %vm1022, %vm1023
        %v1025 = vsel %vm1024, %v1016, %v1021
        %v1026 = vrsqrt.pop %v1015
        %v1027 = vmul.f32 %v1026, %v1015
        %v1028 = vmul.f32 %v1027, %v1026
        %v1029 = vmul.f32 0.5, %v1028
        %v1030 = vsub.f32 1.5, %v1029
        %v1031 = vmul.f32 %v1026, %v1030
        %vm1032 = vweird.f32 %v1015
        %vm1033 = vweird.f32 %v1026
        %vm1034 = vmor %vm1032, %vm1033
        %v1035 = vsel %vm1034, %v1026, %v1031
        %v1036 = vmul.f32 %v1012, %v1025
        %v1037 = vmul.f32 %v1013, %v1035
        %v1039 = vperm.slane %v990, 0
        %v1041 = vmul.f32 %v1036, %v1039
        %v1042 = vmul.f32 %v1037, %v1039
        %v1044 = vperm.slane %v991, 0
        %v1046 = vadd.f32 %v1041, %v1044
        %v1047 = vadd.f32 %v1042, %v1044
        %1048 = vst [vmem:[#allocation2] sm:$0xff] %v1046
        %1049 = vst [vmem:[#allocation2 + $0x8] sm:$0xff] %v1047
      $region112: #{bert_model_forward.1} parent=107 // pred_fallthru
        _
      %v1050 = vld [vmem:[#allocation2] sm:$0xff]
      %v1051 = vld [vmem:[#allocation2 + $0x8] sm:$0xff]
      %v1052 = vld [vmem:[%s921] sm:$0xff]
      %v1053 = vld [vmem:[%s921 + $0x8] sm:$0xff]
      %v1054 = vld [vmem:[%s921 + $0x10] sm:$0xff]
      %v1055 = vld [vmem:[%s921 + $0x18] sm:$0xff]
      %v1056 = vld [vmem:[%s921 + $0x20] sm:$0xff]
      %v1057 = vld [vmem:[%s921 + $0x28] sm:$0xff]
      %v1058 = vld [vmem:[%s921 + $0x30] sm:$0xff]
      %v1059 = vld [vmem:[%s921 + $0x38] sm:$0xff]
      %v1060 = vld [vmem:[%s921 + $0x40] sm:$0xff]
      %v1061 = vld [vmem:[%s921 + $0x48] sm:$0xff]
      %v1062 = vld [vmem:[%s921 + $0x50] sm:$0xff]
      %v1063 = vld [vmem:[%s921 + $0x58] sm:$0xff]
      %v1064 = vld [vmem:[%s921 + $0x60] sm:$0xff]
      %v1065 = vld [vmem:[%s921 + $0x68] sm:$0xff]
      %v1066 = vld [vmem:[%s921 + $0x70] sm:$0xff]
      %v1067 = vld [vmem:[%s921 + $0x78] sm:$0xff]
      %v1068 = vld [vmem:[%s921 + $0x80] sm:$0xff]
      %v1069 = vld [vmem:[%s921 + $0x88] sm:$0xff]
      %v1070 = vld [vmem:[%s921 + $0x90] sm:$0xff]
      %v1071 = vld [vmem:[%s921 + $0x98] sm:$0xff]
      %v1072 = vld [vmem:[%s921 + $0xa0] sm:$0xff]
      %v1073 = vld [vmem:[%s921 + $0xa8] sm:$0xff]
      %v1074 = vld [vmem:[%s921 + $0xb0] sm:$0xff]
      %v1075 = vld [vmem:[%s921 + $0xb8] sm:$0xff]
      %v1076 = vld [vmem:[%s921 + $0xc0] sm:$0xff]
      %v1077 = vld [vmem:[%s921 + $0xc8] sm:$0xff]
      %v1078 = vld [vmem:[%s921 + $0xd0] sm:$0xff]
      %v1079 = vld [vmem:[%s921 + $0xd8] sm:$0xff]
      %v1080 = vld [vmem:[%s921 + $0xe0] sm:$0xff]
      %v1081 = vld [vmem:[%s921 + $0xe8] sm:$0xff]
      %v1082 = vld [vmem:[%s921 + $0xf0] sm:$0xff]
      %v1083 = vld [vmem:[%s921 + $0xf8] sm:$0xff]
      %v1084 = vld [vmem:[%s925] sm:$0x3]
      %v1086 = vrot.slane %v1084, 1
      %v1087 = vld [vmem:[%s930] sm:$0xff]
      %v1088 = vld [vmem:[%s930 + $0x8] sm:$0xff]
      %v1089 = vld [vmem:[%s930 + $0x10] sm:$0xff]
      %v1090 = vld [vmem:[%s930 + $0x18] sm:$0xff]
      %v1091 = vld [vmem:[%s930 + $0x20] sm:$0xff]
      %v1092 = vld [vmem:[%s930 + $0x28] sm:$0xff]
      %v1093 = vld [vmem:[%s930 + $0x30] sm:$0xff]
      %v1094 = vld [vmem:[%s930 + $0x38] sm:$0xff]
      %v1095 = vld [vmem:[%s930 + $0x40] sm:$0xff]
      %v1096 = vld [vmem:[%s930 + $0x48] sm:$0xff]
      %v1097 = vld [vmem:[%s930 + $0x50] sm:$0xff]
      %v1098 = vld [vmem:[%s930 + $0x58] sm:$0xff]
      %v1099 = vld [vmem:[%s930 + $0x60] sm:$0xff]
      %v1100 = vld [vmem:[%s930 + $0x68] sm:$0xff]
      %v1101 = vld [vmem:[%s930 + $0x70] sm:$0xff]
      %v1102 = vld [vmem:[%s930 + $0x78] sm:$0xff]
      %v1103 = vld [vmem:[%s930 + $0x80] sm:$0xff]
      %v1104 = vld [vmem:[%s930 + $0x88] sm:$0xff]
      %v1105 = vld [vmem:[%s930 + $0x90] sm:$0xff]
      %v1106 = vld [vmem:[%s930 + $0x98] sm:$0xff]
      %v1107 = vld [vmem:[%s930 + $0xa0] sm:$0xff]
      %v1108 = vld [vmem:[%s930 + $0xa8] sm:$0xff]
      %v1109 = vld [vmem:[%s930 + $0xb0] sm:$0xff]
      %v1110 = vld [vmem:[%s930 + $0xb8] sm:$0xff]
      %v1111 = vld [vmem:[%s930 + $0xc0] sm:$0xff]
      %v1112 = vld [vmem:[%s930 + $0xc8] sm:$0xff]
      %v1113 = vld [vmem:[%s930 + $0xd0] sm:$0xff]
      %v1114 = vld [vmem:[%s930 + $0xd8] sm:$0xff]
      %v1115 = vld [vmem:[%s930 + $0xe0] sm:$0xff]
      %v1116 = vld [vmem:[%s930 + $0xe8] sm:$0xff]
      %v1117 = vld [vmem:[%s930 + $0xf0] sm:$0xff]
      %v1118 = vld [vmem:[%s930 + $0xf8] sm:$0xff]
      %v1119 = vld [vmem:[%s934] sm:$0x3]
      %v1121 = vrot.slane %v1119, 1
      %v1122 = vld [vmem:[%s939] sm:$0xff]
      %v1123 = vld [vmem:[%s939 + $0x8] sm:$0xff]
      %v1124 = vld [vmem:[%s939 + $0x10] sm:$0xff]
      %v1125 = vld [vmem:[%s939 + $0x18] sm:$0xff]
      %v1126 = vld [vmem:[%s939 + $0x20] sm:$0xff]
      %v1127 = vld [vmem:[%s939 + $0x28] sm:$0xff]
      %v1128 = vld [vmem:[%s939 + $0x30] sm:$0xff]
      %v1129 = vld [vmem:[%s939 + $0x38] sm:$0xff]
      %v1130 = vld [vmem:[%s939 + $0x40] sm:$0xff]
      %v1131 = vld [vmem:[%s939 + $0x48] sm:$0xff]
      %v1132 = vld [vmem:[%s939 + $0x50] sm:$0xff]
      %v1133 = vld [vmem:[%s939 + $0x58] sm:$0xff]
      %v1134 = vld [vmem:[%s939 + $0x60] sm:$0xff]
      %v1135 = vld [vmem:[%s939 + $0x68] sm:$0xff]
      %v1136 = vld [vmem:[%s939 + $0x70] sm:$0xff]
      %v1137 = vld [vmem:[%s939 + $0x78] sm:$0xff]
      %v1138 = vld [vmem:[%s939 + $0x80] sm:$0xff]
      %v1139 = vld [vmem:[%s939 + $0x88] sm:$0xff]
      %v1140 = vld [vmem:[%s939 + $0x90] sm:$0xff]
      %v1141 = vld [vmem:[%s939 + $0x98] sm:$0xff]
      %v1142 = vld [vmem:[%s939 + $0xa0] sm:$0xff]
      %v1143 = vld [vmem:[%s939 + $0xa8] sm:$0xff]
      %v1144 = vld [vmem:[%s939 + $0xb0] sm:$0xff]
      %v1145 = vld [vmem:[%s939 + $0xb8] sm:$0xff]
      %v1146 = vld [vmem:[%s939 + $0xc0] sm:$0xff]
      %v1147 = vld [vmem:[%s939 + $0xc8] sm:$0xff]
      %v1148 = vld [vmem:[%s939 + $0xd0] sm:$0xff]
      %v1149 = vld [vmem:[%s939 + $0xd8] sm:$0xff]
      %v1150 = vld [vmem:[%s939 + $0xe0] sm:$0xff]
      %v1151 = vld [vmem:[%s939 + $0xe8] sm:$0xff]
      %v1152 = vld [vmem:[%s939 + $0xf0] sm:$0xff]
      %v1153 = vld [vmem:[%s939 + $0xf8] sm:$0xff]
      %v1154 = vld [vmem:[%s943] sm:$0x3]
      %v1156 = vrot.slane %v1154, 1
      %v1157 = vperm.slane %v1084, 0
      %v1158 = vperm.slane %v1086, 0
      %1161 = vmatpush.msra.mxu0 %v1067
      %1162 = vmatpush.msra.mxu0 %v1066
      %1163 = vmatpush.msra.mxu0 %v1065
      %1164 = vmatpush.msra.mxu0 %v1064
      %1165 = vmatpush.msra.mxu0 %v1063
      %1166 = vmatpush.msra.mxu0 %v1062
      %1167 = vmatpush.msra.mxu0 %v1061
      %1168 = vmatpush.msra.mxu0 %v1060
      %1169 = vmatpush.msra.mxu0 %v1059
      %1170 = vmatpush.msra.mxu0 %v1058
      %1171 = vmatpush.msra.mxu0 %v1057
      %1172 = vmatpush.msra.mxu0 %v1056
      %1173 = vmatpush.msra.mxu0 %v1055
      %1174 = vmatpush.msra.mxu0 %v1054
      %1175 = vmatpush.msra.mxu0 %v1053
      %1176 = vmatpush.msra.mxu0 %v1052
      %1177 = vmatmul.f32.gmra.mxu0 %v1050
      %v1178 = vpop.f32.mrf.mxu0
      %v1179 = vadd.f32 %v1157, %v1178
      %1180 = vdwg.mxu0
      %1181 = vmatpush.msra.mxu0 %v1083
      %1182 = vmatpush.msra.mxu0 %v1082
      %1183 = vmatpush.msra.mxu0 %v1081
      %1184 = vmatpush.msra.mxu0 %v1080
      %1185 = vmatpush.msra.mxu0 %v1079
      %1186 = vmatpush.msra.mxu0 %v1078
      %1187 = vmatpush.msra.mxu0 %v1077
      %1188 = vmatpush.msra.mxu0 %v1076
      %1189 = vmatpush.msra.mxu0 %v1075
      %1190 = vmatpush.msra.mxu0 %v1074
      %1191 = vmatpush.msra.mxu0 %v1073
      %1192 = vmatpush.msra.mxu0 %v1072
      %1193 = vmatpush.msra.mxu0 %v1071
      %1194 = vmatpush.msra.mxu0 %v1070
      %1195 = vmatpush.msra.mxu0 %v1069
      %1196 = vmatpush.msra.mxu0 %v1068
      %1197 = vmatmul.f32.gmra.mxu0 %v1050
      %v1198 = vpop.f32.mrf.mxu0
      %v1199 = vadd.f32 %v1158, %v1198
      %1200 = vdwg.mxu0
      %1201 = vmatpush.msra.mxu0 %v1067
      %1202 = vmatpush.msra.mxu0 %v1066
      %1203 = vmatpush.msra.mxu0 %v1065
      %1204 = vmatpush.msra.mxu0 %v1064
      %1205 = vmatpush.msra.mxu0 %v1063
      %1206 = vmatpush.msra.mxu0 %v1062
      %1207 = vmatpush.msra.mxu0 %v1061
      %1208 = vmatpush.msra.mxu0 %v1060
      %1209 = vmatpush.msra.mxu0 %v1059
      %1210 = vmatpush.msra.mxu0 %v1058
      %1211 = vmatpush.msra.mxu0 %v1057
      %1212 = vmatpush.msra.mxu0 %v1056
      %1213 = vmatpush.msra.mxu0 %v1055
      %1214 = vmatpush.msra.mxu0 %v1054
      %1215 = vmatpush.msra.mxu0 %v1053
      %1216 = vmatpush.msra.mxu0 %v1052
      %1217 = vmatmul.f32.gmra.mxu0 %v1051
      %v1218 = vpop.f32.mrf.mxu0
      %v1219 = vadd.f32 %v1157, %v1218
      %1220 = vdwg.mxu0
      %1221 = vmatpush.msra.mxu0 %v1083
      %1222 = vmatpush.msra.mxu0 %v1082
      %1223 = vmatpush.msra.mxu0 %v1081
      %1224 = vmatpush.msra.mxu0 %v1080
      %1225 = vmatpush.msra.mxu0 %v1079
      %1226 = vmatpush.msra.mxu0 %v1078
      %1227 = vmatpush.msra.mxu0 %v1077
      %1228 = vmatpush.msra.mxu0 %v1076
      %1229 = vmatpush.msra.mxu0 %v1075
      %1230 = vmatpush.msra.mxu0 %v1074
      %1231 = vmatpush.msra.mxu0 %v1073
      %1232 = vmatpush.msra.mxu0 %v1072
      %1233 = vmatpush.msra.mxu0 %v1071
      %1234 = vmatpush.msra.mxu0 %v1070
      %1235 = vmatpush.msra.mxu0 %v1069
      %1236 = vmatpush.msra.mxu0 %v1068
      %1237 = vmatmul.f32.gmra.mxu0 %v1051
      %v1238 = vpop.f32.mrf.mxu0
      %v1239 = vadd.f32 %v1158, %v1238
      %1240 = vdwg.mxu0
      %v1241 = vperm.slane %v1119, 0
      %v1242 = vperm.slane %v1121, 0
      %1245 = vmatpush.msra.mxu0 %v1102
      %1246 = vmatpush.msra.mxu0 %v1101
      %1247 = vmatpush.msra.mxu0 %v1100
      %1248 = vmatpush.msra.mxu0 %v1099
      %1249 = vmatpush.msra.mxu0 %v1098
      %1250 = vmatpush.msra.mxu0 %v1097
      %1251 = vmatpush.msra.mxu0 %v1096
      %1252 = vmatpush.msra.mxu0 %v1095
      %1253 = vmatpush.msra.mxu0 %v1094
      %1254 = vmatpush.msra.mxu0 %v1093
      %1255 = vmatpush.msra.mxu0 %v1092
      %1256 = vmatpush.msra.mxu0 %v1091
      %1257 = vmatpush.msra.mxu0 %v1090
      %1258 = vmatpush.msra.mxu0 %v1089
      %1259 = vmatpush.msra.mxu0 %v1088
      %1260 = vmatpush.msra.mxu0 %v1087
      %1261 = vmatmul.f32.gmra.mxu0 %v1050
      %v1262 = vpop.f32.mrf.mxu0
      %v1263 = vadd.f32 %v1241, %v1262
      %1264 = vdwg.mxu0
      %1265 = vmatpush.msra.mxu0 %v1118
      %1266 = vmatpush.msra.mxu0 %v1117
      %1267 = vmatpush.msra.mxu0 %v1116
      %1268 = vmatpush.msra.mxu0 %v1115
      %1269 = vmatpush.msra.mxu0 %v1114
      %1270 = vmatpush.msra.mxu0 %v1113
      %1271 = vmatpush.msra.mxu0 %v1112
      %1272 = vmatpush.msra.mxu0 %v1111
      %1273 = vmatpush.msra.mxu0 %v1110
      %1274 = vmatpush.msra.mxu0 %v1109
      %1275 = vmatpush.msra.mxu0 %v1108
      %1276 = vmatpush.msra.mxu0 %v1107
      %1277 = vmatpush.msra.mxu0 %v1106
      %1278 = vmatpush.msra.mxu0 %v1105
      %1279 = vmatpush.msra.mxu0 %v1104
      %1280 = vmatpush.msra.mxu0 %v1103
      %1281 = vmatmul.f32.gmra.mxu0 %v1050
      %v1282 = vpop.f32.mrf.mxu0
      %v1283 = vadd.f32 %v1242, %v1282
      %1284 = vdwg.mxu0
      %1285 = vmatpush.msra.mxu0 %v1102
      %1286 = vmatpush.msra.mxu0 %v1101
      %1287 = vmatpush.msra.mxu0 %v1100
      %1288 = vmatpush.msra.mxu0 %v1099
      %1289 = vmatpush.msra.mxu0 %v1098
      %1290 = vmatpush.msra.mxu0 %v1097
      %1291 = vmatpush.msra.mxu0 %v1096
      %1292 = vmatpush.msra.mxu0 %v1095
      %1293 = vmatpush.msra.mxu0 %v1094
      %1294 = vmatpush.msra.mxu0 %v1093
      %1295 = vmatpush.msra.mxu0 %v1092
      %1296 = vmatpush.msra.mxu0 %v1091
      %1297 = vmatpush.msra.mxu0 %v1090
      %1298 = vmatpush.msra.mxu0 %v1089
      %1299 = vmatpush.msra.mxu0 %v1088
      %1300 = vmatpush.msra.mxu0 %v1087
      %1301 = vmatmul.f32.gmra.mxu0 %v1051
      %v1302 = vpop.f32.mrf.mxu0
      %v1303 = vadd.f32 %v1241, %v1302
      %1304 = vdwg.mxu0
      %1305 = vmatpush.msra.mxu0 %v1118
      %1306 = vmatpush.msra.mxu0 %v1117
      %1307 = vmatpush.msra.mxu0 %v1116
      %1308 = vmatpush.msra.mxu0 %v1115
      %1309 = vmatpush.msra.mxu0 %v1114
      %1310 = vmatpush.msra.mxu0 %v1113
      %1311 = vmatpush.msra.mxu0 %v1112
      %1312 = vmatpush.msra.mxu0 %v1111
      %1313 = vmatpush.msra.mxu0 %v1110
      %1314 = vmatpush.msra.mxu0 %v1109
      %1315 = vmatpush.msra.mxu0 %v1108
      %1316 = vmatpush.msra.mxu0 %v1107
      %1317 = vmatpush.msra.mxu0 %v1106
      %1318 = vmatpush.msra.mxu0 %v1105
      %1319 = vmatpush.msra.mxu0 %v1104
      %1320 = vmatpush.msra.mxu0 %v1103
      %1321 = vmatmul.f32.gmra.mxu0 %v1051
      %v1322 = vpop.f32.mrf.mxu0
      %v1323 = vadd.f32 %v1242, %v1322
      %1324 = vdwg.mxu0
      %v1325 = vperm.slane %v1154, 0
      %v1326 = vperm.slane %v1156, 0
      %1329 = vmatpush.msra.mxu0 %v1137
      %1330 = vmatpush.msra.mxu0 %v1136
      %1331 = vmatpush.msra.mxu0 %v1135
      %1332 = vmatpush.msra.mxu0 %v1134
      %1333 = vmatpush.msra.mxu0 %v1133
      %1334 = vmatpush.msra.mxu0 %v1132
      %1335 = vmatpush.msra.mxu0 %v1131
      %1336 = vmatpush.msra.mxu0 %v1130
      %1337 = vmatpush.msra.mxu0 %v1129
      %1338 = vmatpush.msra.mxu0 %v1128
      %1339 = vmatpush.msra.mxu0 %v1127
      %1340 = vmatpush.msra.mxu0 %v1126
      %1341 = vmatpush.msra.mxu0 %v1125
      %1342 = vmatpush.msra.mxu0 %v1124
      %1343 = vmatpush.msra.mxu0 %v1123
      %1344 = vmatpush.msra.mxu0 %v1122
      %1345 = vmatmul.f32.gmra.mxu0 %v1050
      %v1346 = vpop.f32.mrf.mxu0
      %v1347 = vadd.f32 %v1325, %v1346
      %1348 = vdwg.mxu0
      %1349 = vmatpush.msra.mxu0 %v1153
      %1350 = vmatpush.msra.mxu0 %v1152
      %1351 = vmatpush.msra.mxu0 %v1151
      %1352 = vmatpush.msra.mxu0 %v1150
      %1353 = vmatpush.msra.mxu0 %v1149
      %1354 = vmatpush.msra.mxu0 %v1148
      %1355 = vmatpush.msra.mxu0 %v1147
      %1356 = vmatpush.msra.mxu0 %v1146
      %1357 = vmatpush.msra.mxu0 %v1145
      %1358 = vmatpush.msra.mxu0 %v1144
      %1359 = vmatpush.msra.mxu0 %v1143
      %1360 = vmatpush.msra.mxu0 %v1142
      %1361 = vmatpush.msra.mxu0 %v1141
      %1362 = vmatpush.msra.mxu0 %v1140
      %1363 = vmatpush.msra.mxu0 %v1139
      %1364 = vmatpush.msra.mxu0 %v1138
      %1365 = vmatmul.f32.gmra.mxu0 %v1050
      %v1366 = vpop.f32.mrf.mxu0
      %v1367 = vadd.f32 %v1326, %v1366
      %1368 = vdwg.mxu0
      %1369 = vmatpush.msra.mxu0 %v1137
      %1370 = vmatpush.msra.mxu0 %v1136
      %1371 = vmatpush.msra.mxu0 %v1135
      %1372 = vmatpush.msra.mxu0 %v1134
      %1373 = vmatpush.msra.mxu0 %v1133
      %1374 = vmatpush.msra.mxu0 %v1132
      %1375 = vmatpush.msra.mxu0 %v1131
      %1376 = vmatpush.msra.mxu0 %v1130
      %1377 = vmatpush.msra.mxu0 %v1129
      %1378 = vmatpush.msra.mxu0 %v1128
      %1379 = vmatpush.msra.mxu0 %v1127
      %1380 = vmatpush.msra.mxu0 %v1126
      %1381 = vmatpush.msra.mxu0 %v1125
      %1382 = vmatpush.msra.mxu0 %v1124
      %1383 = vmatpush.msra.mxu0 %v1123
      %1384 = vmatpush.msra.mxu0 %v1122
      %1385 = vmatmul.f32.gmra.mxu0 %v1051
      %v1386 = vpop.f32.mrf.mxu0
      %v1387 = vadd.f32 %v1325, %v1386
      %1388 = vdwg.mxu0
      %1389 = vmatpush.msra.mxu0 %v1153
      %1390 = vmatpush.msra.mxu0 %v1152
      %1391 = vmatpush.msra.mxu0 %v1151
      %1392 = vmatpush.msra.mxu0 %v1150
      %1393 = vmatpush.msra.mxu0 %v1149
      %1394 = vmatpush.msra.mxu0 %v1148
      %1395 = vmatpush.msra.mxu0 %v1147
      %1396 = vmatpush.msra.mxu0 %v1146
      %1397 = vmatpush.msra.mxu0 %v1145
      %1398 = vmatpush.msra.mxu0 %v1144
      %1399 = vmatpush.msra.mxu0 %v1143
      %1400 = vmatpush.msra.mxu0 %v1142
      %1401 = vmatpush.msra.mxu0 %v1141
      %1402 = vmatpush.msra.mxu0 %v1140
      %1403 = vmatpush.msra.mxu0 %v1139
      %1404 = vmatpush.msra.mxu0 %v1138
      %1405 = vmatmul.f32.gmra.mxu0 %v1051
      %v1406 = vpop.f32.mrf.mxu0
      %v1407 = vadd.f32 %v1326, %v1406
      %1408 = vdwg.mxu0
      %vm1409 = vcmask 130048
      %v1411 = vsel %vm1409, %v1179, 0
      %v1414 = vsel %vm1409, %v1263, 0
      %1416 = vmatpush.xpose.msra.mxu0 0.0
      %1417 = vmatpush.xpose.msra.mxu0 0.0
      %1418 = vmatpush.xpose.msra.mxu0 0.0
      %1419 = vmatpush.xpose.msra.mxu0 0.0
      %1420 = vmatpush.xpose.msra.mxu0 0.0
      %1421 = vmatpush.xpose.msra.mxu0 0.0
      %1422 = vmatpush.xpose.msra.mxu0 0.0
      %1423 = vmatpush.xpose.msra.mxu0 0.0
      %1424 = vmatpush.xpose.msra.mxu0 0.0
      %1425 = vmatpush.xpose.msra.mxu0 0.0
      %1426 = vmatpush.xpose.msra.mxu0 0.0
      %1427 = vmatpush.xpose.msra.mxu0 0.0
      %1428 = vmatpush.xpose.msra.mxu0 0.0
      %1429 = vmatpush.xpose.msra.mxu0 0.0
      %1430 = vmatpush.xpose.msra.mxu0 0.0
      %1431 = vmatpush.xpose.msra.mxu0 %v1414
      %1432 = vmatmul.f32.gmra.mxu0 %v1411
      %v1433 = vpop.f32.mrf.mxu0
      %v1434 = vadd.f32 0.0, %v1433
      %1435 = vdwg.mxu0
      %v1437 = vsel %vm1409, %v1199, 0
      %v1440 = vsel %vm1409, %v1283, 0
      %1442 = vmatpush.xpose.msra.mxu0 0.0
      %1443 = vmatpush.xpose.msra.mxu0 0.0
      %1444 = vmatpush.xpose.msra.mxu0 0.0
      %1445 = vmatpush.xpose.msra.mxu0 0.0
      %1446 = vmatpush.xpose.msra.mxu0 0.0
      %1447 = vmatpush.xpose.msra.mxu0 0.0
      %1448 = vmatpush.xpose.msra.mxu0 0.0
      %1449 = vmatpush.xpose.msra.mxu0 0.0
      %1450 = vmatpush.xpose.msra.mxu0 0.0
      %1451 = vmatpush.xpose.msra.mxu0 0.0
      %1452 = vmatpush.xpose.msra.mxu0 0.0
      %1453 = vmatpush.xpose.msra.mxu0 0.0
      %1454 = vmatpush.xpose.msra.mxu0 0.0
      %1455 = vmatpush.xpose.msra.mxu0 0.0
      %1456 = vmatpush.xpose.msra.mxu0 0.0
      %1457 = vmatpush.xpose.msra.mxu0 %v1440
      %1458 = vmatmul.f32.gmra.mxu0 %v1437
      %v1459 = vpop.f32.mrf.mxu0
      %v1460 = vadd.f32 0.0, %v1459
      %1461 = vdwg.mxu0
      %v1463 = vsel %vm1409, %v1219, 0
      %v1466 = vsel %vm1409, %v1303, 0
      %1468 = vmatpush.xpose.msra.mxu0 0.0
      %1469 = vmatpush.xpose.msra.mxu0 0.0
      %1470 = vmatpush.xpose.msra.mxu0 0.0
      %1471 = vmatpush.xpose.msra.mxu0 0.0
      %1472 = vmatpush.xpose.msra.mxu0 0.0
      %1473 = vmatpush.xpose.msra.mxu0 0.0
      %1474 = vmatpush.xpose.msra.mxu0 0.0
      %1475 = vmatpush.xpose.msra.mxu0 0.0
      %1476 = vmatpush.xpose.msra.mxu0 0.0
      %1477 = vmatpush.xpose.msra.mxu0 0.0
      %1478 = vmatpush.xpose.msra.mxu0 0.0
      %1479 = vmatpush.xpose.msra.mxu0 0.0
      %1480 = vmatpush.xpose.msra.mxu0 0.0
      %1481 = vmatpush.xpose.msra.mxu0 0.0
      %1482 = vmatpush.xpose.msra.mxu0 0.0
      %1483 = vmatpush.xpose.msra.mxu0 %v1466
      %1484 = vmatmul.f32.gmra.mxu0 %v1463
      %v1485 = vpop.f32.mrf.mxu0
      %v1486 = vadd.f32 0.0, %v1485
      %1487 = vdwg.mxu0
      %v1489 = vsel %vm1409, %v1239, 0
      %v1492 = vsel %vm1409, %v1323, 0
      %1494 = vmatpush.xpose.msra.mxu0 0.0
      %1495 = vmatpush.xpose.msra.mxu0 0.0
      %1496 = vmatpush.xpose.msra.mxu0 0.0
      %1497 = vmatpush.xpose.msra.mxu0 0.0
      %1498 = vmatpush.xpose.msra.mxu0 0.0
      %1499 = vmatpush.xpose.msra.mxu0 0.0
      %1500 = vmatpush.xpose.msra.mxu0 0.0
      %1501 = vmatpush.xpose.msra.mxu0 0.0
      %1502 = vmatpush.xpose.msra.mxu0 0.0
      %1503 = vmatpush.xpose.msra.mxu0 0.0
      %1504 = vmatpush.xpose.msra.mxu0 0.0
      %1505 = vmatpush.xpose.msra.mxu0 0.0
      %1506 = vmatpush.xpose.msra.mxu0 0.0
      %1507 = vmatpush.xpose.msra.mxu0 0.0
      %1508 = vmatpush.xpose.msra.mxu0 0.0
      %1509 = vmatpush.xpose.msra.mxu0 %v1492
      %1510 = vmatmul.f32.gmra.mxu0 %v1489
      %v1511 = vpop.f32.mrf.mxu0
      %v1512 = vadd.f32 0.0, %v1511
      %1513 = vdwg.mxu0
      %v1514 = vmul.f32 %v1434, 0.25
      %v1515 = vmul.f32 %v1460, 0.25
      %v1516 = vmul.f32 %v1486, 0.25
      %v1517 = vmul.f32 %v1512, 0.25
      %v1518 = vld [vmem:[%s915] sm:$0x1]
      %v1519 = vld [vmem:[%s915 + $0x1] sm:$0x1]
      %v1520 = vld [vmem:[%s915 + $0x2] sm:$0x1]
      %v1521 = vld [vmem:[%s915 + $0x3] sm:$0x1]
      %v1526 = vperm.slane %v1518, 0
      %v1527 = vperm.slane %v1519, 0
      %v1528 = vperm.slane %v1520, 0
      %v1529 = vperm.slane %v1521, 0
      %v1534 = vadd.f32 %v1514, %v1526
      %v1535 = vadd.f32 %v1515, %v1527
      %v1536 = vadd.f32 %v1516, %v1528
      %v1537 = vadd.f32 %v1517, %v1529
      %vm1538 = vcmask 64512
      %v1539 = vsel %vm1538, %v1534, -inf
      %1540 = vmax.xlane.f32.xlu0 %v1539
      %v1541 = vpop.xlane.xlu0 %1540
      %v1542 = vsel %vm1538, %v1535, -inf
      %1543 = vmax.xlane.f32.xlu0 %v1542
      %v1544 = vpop.xlane.xlu0 %1543
      %v1545 = vsel %vm1538, %v1536, -inf
      %1546 = vmax.xlane.f32.xlu0 %v1545
      %v1547 = vpop.xlane.xlu0 %1546
      %v1548 = vsel %vm1538, %v1537, -inf
      %1549 = vmax.xlane.f32.xlu0 %v1548
      %v1550 = vpop.xlane.xlu0 %1549
      %v1551 = vsub.f32 %v1534, %v1541
      %v1552 = vsub.f32 %v1535, %v1544
      %v1553 = vsub.f32 %v1536, %v1547
      %v1554 = vsub.f32 %v1537, %v1550
      %v1555 = vmul.f32 %v1551, 1.442695
      %v1556 = vpow.pop %v1555
      %v1557 = vmul.f32 %v1552, 1.442695
      %v1558 = vpow.pop %v1557
      %v1559 = vmul.f32 %v1553, 1.442695
      %v1560 = vpow.pop %v1559
      %v1561 = vmul.f32 %v1554, 1.442695
      %v1562 = vpow.pop %v1561
      %v1563 = vsel %vm1538, %v1556, 0.0
      %1564 = vadd.xlane.f32.xlu0 %v1563
      %v1565 = vpop.xlane.xlu0 %1564
      %v1566 = vsel %vm1538, %v1558, 0.0
      %1567 = vadd.xlane.f32.xlu0 %v1566
      %v1568 = vpop.xlane.xlu0 %1567
      %v1569 = vsel %vm1538, %v1560, 0.0
      %1570 = vadd.xlane.f32.xlu0 %v1569
      %v1571 = vpop.xlane.xlu0 %1570
      %v1572 = vsel %vm1538, %v1562, 0.0
      %1573 = vadd.xlane.f32.xlu0 %v1572
      %v1574 = vpop.xlane.xlu0 %1573
      %v1575 = vrcp.pop %v1565
      %v1576 = vrcp.pop %v1568
      %v1577 = vrcp.pop %v1571
      %v1578 = vrcp.pop %v1574
      %v1579 = vmul.f32 %v1556, %v1575
      %v1580 = vmul.f32 %v1558, %v1576
      %v1581 = vmul.f32 %v1560, %v1577
      %v1582 = vmul.f32 %v1562, %v1578
      %v1584 = vsel %vm1538, %v1579, 0
      %1586 = vmatpush.msra.mxu0 0.0
      %1587 = vmatpush.msra.mxu0 0.0
      %1588 = vmatpush.msra.mxu0 0.0
      %1589 = vmatpush.msra.mxu0 0.0
      %1590 = vmatpush.msra.mxu0 0.0
      %1591 = vmatpush.msra.mxu0 0.0
      %1592 = vmatpush.msra.mxu0 0.0
      %1593 = vmatpush.msra.mxu0 0.0
      %1594 = vmatpush.msra.mxu0 0.0
      %1595 = vmatpush.msra.mxu0 0.0
      %1596 = vmatpush.msra.mxu0 0.0
      %1597 = vmatpush.msra.mxu0 0.0
      %1598 = vmatpush.msra.mxu0 0.0
      %1599 = vmatpush.msra.mxu0 0.0
      %1600 = vmatpush.msra.mxu0 0.0
      %1601 = vmatpush.msra.mxu0 %v1347
      %1602 = vmatmul.f32.gmra.mxu0 %v1584
      %v1603 = vpop.f32.mrf.mxu0
      %v1604 = vadd.f32 0.0, %v1603
      %1605 = vdwg.mxu0
      %v1607 = vsel %vm1538, %v1580, 0
      %1609 = vmatpush.msra.mxu0 0.0
      %1610 = vmatpush.msra.mxu0 0.0
      %1611 = vmatpush.msra.mxu0 0.0
      %1612 = vmatpush.msra.mxu0 0.0
      %1613 = vmatpush.msra.mxu0 0.0
      %1614 = vmatpush.msra.mxu0 0.0
      %1615 = vmatpush.msra.mxu0 0.0
      %1616 = vmatpush.msra.mxu0 0.0
      %1617 = vmatpush.msra.mxu0 0.0
      %1618 = vmatpush.msra.mxu0 0.0
      %1619 = vmatpush.msra.mxu0 0.0
      %1620 = vmatpush.msra.mxu0 0.0
      %1621 = vmatpush.msra.mxu0 0.0
      %1622 = vmatpush.msra.mxu0 0.0
      %1623 = vmatpush.msra.mxu0 0.0
      %1624 = vmatpush.msra.mxu0 %v1367
      %1625 = vmatmul.f32.gmra.mxu0 %v1607
      %v1626 = vpop.f32.mrf.mxu0
      %v1627 = vadd.f32 0.0, %v1626
      %1628 = vdwg.mxu0
      %v1630 = vsel %vm1538, %v1581, 0
      %1632 = vmatpush.msra.mxu0 0.0
      %1633 = vmatpush.msra.mxu0 0.0
      %1634 = vmatpush.msra.mxu0 0.0
      %1635 = vmatpush.msra.mxu0 0.0
      %1636 = vmatpush.msra.mxu0 0.0
      %1637 = vmatpush.msra.mxu0 0.0
      %1638 = vmatpush.msra.mxu0 0.0
      %1639 = vmatpush.msra.mxu0 0.0
      %1640 = vmatpush.msra.mxu0 0.0
      %1641 = vmatpush.msra.mxu0 0.0
      %1642 = vmatpush.msra.mxu0 0.0
      %1643 = vmatpush.msra.mxu0 0.0
      %1644 = vmatpush.msra.mxu0 0.0
      %1645 = vmatpush.msra.mxu0 0.0
      %1646 = vmatpush.msra.mxu0 0.0
      %1647 = vmatpush.msra.mxu0 %v1387
      %1648 = vmatmul.f32.gmra.mxu0 %v1630
      %v1649 = vpop.f32.mrf.mxu0
      %v1650 = vadd.f32 0.0, %v1649
      %1651 = vdwg.mxu0
      %v1653 = vsel %vm1538, %v1582, 0
      %1655 = vmatpush.msra.mxu0 0.0
      %1656 = vmatpush.msra.mxu0 0.0
      %1657 = vmatpush.msra.mxu0 0.0
      %1658 = vmatpush.msra.mxu0 0.0
      %1659 = vmatpush.msra.mxu0 0.0
      %1660 = vmatpush.msra.mxu0 0.0
      %1661 = vmatpush.msra.mxu0 0.0
      %1662 = vmatpush.msra.mxu0 0.0
      %1663 = vmatpush.msra.mxu0 0.0
      %1664 = vmatpush.msra.mxu0 0.0
      %1665 = vmatpush.msra.mxu0 0.0
      %1666 = vmatpush.msra.mxu0 0.0
      %1667 = vmatpush.msra.mxu0 0.0
      %1668 = vmatpush.msra.mxu0 0.0
      %1669 = vmatpush.msra.mxu0 0.0
      %1670 = vmatpush.msra.mxu0 %v1407
      %1671 = vmatmul.f32.gmra.mxu0 %v1653
      %v1672 = vpop.f32.mrf.mxu0
      %v1673 = vadd.f32 0.0, %v1672
      %1674 = vdwg.mxu0
      %v1675 = vld [vmem:[%s948] sm:$0xff]
      %v1676 = vld [vmem:[%s948 + $0x8] sm:$0xff]
      %v1677 = vld [vmem:[%s948 + $0x10] sm:$0xff]
      %v1678 = vld [vmem:[%s948 + $0x18] sm:$0xff]
      %v1680 = vsel %vm1409, %v1604, 0
      %1682 = vmatpush.msra.mxu0 0.0
      %1683 = vmatpush.msra.mxu0 0.0
      %1684 = vmatpush.msra.mxu0 0.0
      %1685 = vmatpush.msra.mxu0 0.0
      %1686 = vmatpush.msra.mxu0 0.0
      %1687 = vmatpush.msra.mxu0 0.0
      %1688 = vmatpush.msra.mxu0 0.0
      %1689 = vmatpush.msra.mxu0 0.0
      %1690 = vmatpush.msra.mxu0 0.0
      %1691 = vmatpush.msra.mxu0 0.0
      %1692 = vmatpush.msra.mxu0 0.0
      %1693 = vmatpush.msra.mxu0 0.0
      %1694 = vmatpush.msra.mxu0 0.0
      %1695 = vmatpush.msra.mxu0 0.0
      %1696 = vmatpush.msra.mxu0 %v1676
      %1697 = vmatpush.msra.mxu0 %v1675
      %1698 = vmatmul.f32.gmra.mxu0 %v1680
      %v1699 = vpop.f32.mrf.mxu0
      %v1700 = vadd.f32 0.0, %v1699
      %1701 = vdwg.mxu0
      %v1703 = vsel %vm1409, %v1627, 0
      %1705 = vmatpush.msra.mxu0 0.0
      %1706 = vmatpush.msra.mxu0 0.0
      %1707 = vmatpush.msra.mxu0 0.0
      %1708 = vmatpush.msra.mxu0 0.0
      %1709 = vmatpush.msra.mxu0 0.0
      %1710 = vmatpush.msra.mxu0 0.0
      %1711 = vmatpush.msra.mxu0 0.0
      %1712 = vmatpush.msra.mxu0 0.0
      %1713 = vmatpush.msra.mxu0 0.0
      %1714 = vmatpush.msra.mxu0 0.0
      %1715 = vmatpush.msra.mxu0 0.0
      %1716 = vmatpush.msra.mxu0 0.0
      %1717 = vmatpush.msra.mxu0 0.0
      %1718 = vmatpush.msra.mxu0 0.0
      %1719 = vmatpush.msra.mxu0 %v1678
      %1720 = vmatpush.msra.mxu0 %v1677
      %1721 = vmatmul.f32.gmra.mxu0 %v1703
      %v1722 = vpop.f32.mrf.mxu0
      %v1723 = vadd.f32 0.0, %v1722
      %1724 = vdwg.mxu0
      %v1726 = vsel %vm1409, %v1650, 0
      %1728 = vmatpush.msra.mxu0 0.0
      %1729 = vmatpush.msra.mxu0 0.0
      %1730 = vmatpush.msra.mxu0 0.0
      %1731 = vmatpush.msra.mxu0 0.0
      %1732 = vmatpush.msra.mxu0 0.0
      %1733 = vmatpush.msra.mxu0 0.0
      %1734 = vmatpush.msra.mxu0 0.0
      %1735 = vmatpush.msra.mxu0 0.0
      %1736 = vmatpush.msra.mxu0 0.0
      %1737 = vmatpush.msra.mxu0 0.0
      %1738 = vmatpush.msra.mxu0 0.0
      %1739 = vmatpush.msra.mxu0 0.0
      %1740 = vmatpush.msra.mxu0 0.0
      %1741 = vmatpush.msra.mxu0 0.0
      %1742 = vmatpush.msra.mxu0 %v1676
      %1743 = vmatpush.msra.mxu0 %v1675
      %1744 = vmatmul.f32.gmra.mxu0 %v1726
      %v1745 = vpop.f32.mrf.mxu0
      %v1746 = vadd.f32 0.0, %v1745
      %1747 = vdwg.mxu0
      %v1749 = vsel %vm1409, %v1673, 0
      %1751 = vmatpush.msra.mxu0 0.0
      %1752 = vmatpush.msra.mxu0 0.0
      %1753 = vmatpush.msra.mxu0 0.0
      %1754 = vmatpush.msra.mxu0 0.0
      %1755 = vmatpush.msra.mxu0 0.0
      %1756 = vmatpush.msra.mxu0 0.0
      %1757 = vmatpush.msra.mxu0 0.0
      %1758 = vmatpush.msra.mxu0 0.0
      %1759 = vmatpush.msra.mxu0 0.0
      %1760 = vmatpush.msra.mxu0 0.0
      %1761 = vmatpush.msra.mxu0 0.0
      %1762 = vmatpush.msra.mxu0 0.0
      %1763 = vmatpush.msra.mxu0 0.0
      %1764 = vmatpush.msra.mxu0 0.0
      %1765 = vmatpush.msra.mxu0 %v1678
      %1766 = vmatpush.msra.mxu0 %v1677
      %1767 = vmatmul.f32.gmra.mxu0 %v1749
      %v1768 = vpop.f32.mrf.mxu0
      %v1769 = vadd.f32 0.0, %v1768
      %1770 = vdwg.mxu0
      %v1771 = vadd.f32 %v1700, %v1723
      %v1772 = vadd.f32 %v1746, %v1769
      %v1773 = vld [vmem:[%s951] sm:$0x1]
      %v1775 = vperm.slane %v1773, 0
      %v1777 = vadd.f32 %v1771, %v1775
      %v1778 = vadd.f32 %v1772, %v1775
      %v1779 = vadd.f32 %v1050, %v1777
      %v1780 = vadd.f32 %v1051, %v1778
      %v1781 = vld [vmem:[%s954] sm:$0x1]
      %v1782 = vld [vmem:[%s957] sm:$0x1]
      %1783 = vadd.xlane.f32.xlu0 %v1779
      %v1784 = vpop.xlane.xlu0 %1783
      %1785 = vadd.xlane.f32.xlu0 %v1780
      %v1786 = vpop.xlane.xlu0 %1785
      %v1787 = vmul.f32 %v1784, 0.03125
      %v1788 = vmul.f32 %v1786, 0.03125
      %v1789 = vmul.f32 %v1779, %v1779
      %v1790 = vmul.f32 %v1780, %v1780
      %1791 = vadd.xlane.f32.xlu0 %v1789
      %v1792 = vpop.xlane.xlu0 %1791
      %1793 = vadd.xlane.f32.xlu0 %v1790
      %v1794 = vpop.xlane.xlu0 %1793
      %v1795 = vmul.f32 %v1792, 0.03125
      %v1796 = vmul.f32 %v1794, 0.03125
      %v1797 = vmul.f32 %v1787, %v1787
      %v1798 = vmul.f32 %v1788, %v1788
      %v1799 = vsub.f32 %v1795, %v1797
      %v1800 = vsub.f32 %v1796, %v1798
      %v1801 = vmax.f32 %v1799, 0.0
      %v1802 = vmax.f32 %v1800, 0.0
      %v1803 = vsub.f32 %v1779, %v1787
      %v1804 = vsub.f32 %v1780, %v1788
      %v1805 = vadd.f32 %v1801, 1e-12
      %v1806 = vadd.f32 %v1802, 1e-12
      %v1807 = vrsqrt.pop %v1805
      %v1808 = vmul.f32 %v1807, %v1805
      %v1809 = vmul.f32 %v1808, %v1807
      %v1810 = vmul.f32 0.5, %v1809
      %v1811 = vsub.f32 1.5, %v1810
      %v1812 = vmul.f32 %v1807, %v1811
      %vm1813 = vweird.f32 %v1805
      %vm1814 = vweird.f32 %v1807
      %vm1815 = vmor %vm1813, %vm1814
      %v1816 = vsel %vm1815, %v1807, %v1812
      %v1817 = vrsqrt.pop %v1806
      %v1818 = vmul.f32 %v1817, %v1806
      %v1819 = vmul.f32 %v1818, %v1817
      %v1820 = vmul.f32 0.5, %v1819
      %v1821 = vsub.f32 1.5, %v1820
      %v1822 = vmul.f32 %v1817, %v1821
      %vm1823 = vweird.f32 %v1806
      %vm1824 = vweird.f32 %v1817
      %vm1825 = vmor %vm1823, %vm1824
      %v1826 = vsel %vm1825, %v1817, %v1822
      %v1827 = vmul.f32 %v1803, %v1816
      %v1828 = vmul.f32 %v1804, %v1826
      %v1830 = vperm.slane %v1781, 0
      %v1832 = vmul.f32 %v1827, %v1830
      %v1833 = vmul.f32 %v1828, %v1830
      %v1835 = vperm.slane %v1782, 0
      %v1837 = vadd.f32 %v1832, %v1835
      %v1838 = vadd.f32 %v1833, %v1835
      %v1839 = vld [vmem:[%s962] sm:$0xff]
      %v1840 = vld [vmem:[%s962 + $0x8] sm:$0xff]
      %v1841 = vld [vmem:[%s962 + $0x10] sm:$0xff]
      %v1842 = vld [vmem:[%s962 + $0x18] sm:$0xff]
      %v1843 = vld [vmem:[%s962 + $0x20] sm:$0xff]
      %v1844 = vld [vmem:[%s962 + $0x28] sm:$0xff]
      %v1845 = vld [vmem:[%s962 + $0x30] sm:$0xff]
      %v1846 = vld [vmem:[%s962 + $0x38] sm:$0xff]
      %v1847 = vld [vmem:[%s962 + $0x40] sm:$0xff]
      %v1848 = vld [vmem:[%s962 + $0x48] sm:$0xff]
      %v1849 = vld [vmem:[%s962 + $0x50] sm:$0xff]
      %v1850 = vld [vmem:[%s962 + $0x58] sm:$0xff]
      %v1851 = vld [vmem:[%s962 + $0x60] sm:$0xff]
      %v1852 = vld [vmem:[%s962 + $0x68] sm:$0xff]
      %v1853 = vld [vmem:[%s962 + $0x70] sm:$0xff]
      %v1854 = vld [vmem:[%s962 + $0x78] sm:$0xff]
      %v1855 = vld [vmem:[%s965] sm:$0x1]
      %v1857 = vperm.slane %v1855, 0
      %1859 = vmatpush.msra.mxu0 %v1854
      %1860 = vmatpush.msra.mxu0 %v1853
      %1861 = vmatpush.msra.mxu0 %v1852
      %1862 = vmatpush.msra.mxu0 %v1851
      %1863 = vmatpush.msra.mxu0 %v1850
      %1864 = vmatpush.msra.mxu0 %v1849
      %1865 = vmatpush.msra.mxu0 %v1848
      %1866 = vmatpush.msra.mxu0 %v1847
      %1867 = vmatpush.msra.mxu0 %v1846
      %1868 = vmatpush.msra.mxu0 %v1845
      %1869 = vmatpush.msra.mxu0 %v1844
      %1870 = vmatpush.msra.mxu0 %v1843
      %1871 = vmatpush.msra.mxu0 %v1842
      %1872 = vmatpush.msra.mxu0 %v1841
      %1873 = vmatpush.msra.mxu0 %v1840
      %1874 = vmatpush.msra.mxu0 %v1839
      %1875 = vmatmul.f32.gmra.mxu0 %v1837
      %v1876 = vpop.f32.mrf.mxu0
      %v1877 = vadd.f32 %v1857, %v1876
      %1878 = vmatmul.f32.gmra.mxu0 %v1838
      %v1879 = vpop.f32.mrf.mxu0
      %v1880 = vadd.f32 %v1857, %v1879
      %1881 = vdwg.mxu0
      %v1882 = vmul.f32 %v1877, 0.5
      %v1883 = vmul.f32 %v1880, 0.5
      %v1884 = vmul.f32 %v1877, 0.044715
      %v1885 = vmul.f32 %v1880, 0.044715
      %v1886 = vmul.f32 %v1884, %v1877
      %v1887 = vmul.f32 %v1885, %v1880
      %v1888 = vmul.f32 %v1886, %v1877
      %v1889 = vmul.f32 %v1887, %v1880
      %v1890 = vadd.f32 %v1877, %v1888
      %v1891 = vadd.f32 %v1880, %v1889
      %v1892 = vmul.f32 %v1890, 0.7978846
      %v1893 = vmul.f32 %v1891, 0.7978846
      %v1894 = vtanh.pop %v1892
      %v1895 = vtanh.pop %v1893
      %v1896 = vadd.f32 %v1894, 1.0
      %v1897 = vadd.f32 %v1895, 1.0
      %v1898 = vmul.f32 %v1882, %v1896
      %v1899 = vmul.f32 %v1883, %v1897
      %v1900 = vld [vmem:[%s970] sm:$0xff]
      %v1901 = vld [vmem:[%s970 + $0x8] sm:$0xff]
      %v1902 = vld [vmem:[%s970 + $0x10] sm:$0xff]
      %v1903 = vld [vmem:[%s970 + $0x18] sm:$0xff]
      %v1904 = vld [vmem:[%s970 + $0x20] sm:$0xff]
      %v1905 = vld [vmem:[%s970 + $0x28] sm:$0xff]
      %v1906 = vld [vmem:[%s970 + $0x30] sm:$0xff]
      %v1907 = vld [vmem:[%s970 + $0x38] sm:$0xff]
      %v1908 = vld [vmem:[%s970 + $0x40] sm:$0xff]
      %v1909 = vld [vmem:[%s970 + $0x48] sm:$0xff]
      %v1910 = vld [vmem:[%s970 + $0x50] sm:$0xff]
      %v1911 = vld [vmem:[%s970 + $0x58] sm:$0xff]
      %v1912 = vld [vmem:[%s970 + $0x60] sm:$0xff]
      %v1913 = vld [vmem:[%s970 + $0x68] sm:$0xff]
      %v1914 = vld [vmem:[%s970 + $0x70] sm:$0xff]
      %v1915 = vld [vmem:[%s970 + $0x78] sm:$0xff]
      %v1916 = vld [vmem:[%s973] sm:$0x1]
      %v1918 = vperm.slane %v1916, 0
      %1920 = vmatpush.msra.mxu0 %v1915
      %1921 = vmatpush.msra.mxu0 %v1914
      %1922 = vmatpush.msra.mxu0 %v1913
      %1923 = vmatpush.msra.mxu0 %v1912
      %1924 = vmatpush.msra.mxu0 %v1911
      %1925 = vmatpush.msra.mxu0 %v1910
      %1926 = vmatpush.msra.mxu0 %v1909
      %1927 = vmatpush.msra.mxu0 %v1908
      %1928 = vmatpush.msra.mxu0 %v1907
      %1929 = vmatpush.msra.mxu0 %v1906
      %1930 = vmatpush.msra.mxu0 %v1905
      %1931 = vmatpush.msra.mxu0 %v1904
      %1932 = vmatpush.msra.mxu0 %v1903
      %1933 = vmatpush.msra.mxu0 %v1902
      %1934 = vmatpush.msra.mxu0 %v1901
      %1935 = vmatpush.msra.mxu0 %v1900
      %1936 = vmatmul.f32.gmra.mxu0 %v1898
      %v1937 = vpop.f32.mrf.mxu0
      %v1938 = vadd.f32 %v1918, %v1937
      %1939 = vmatmul.f32.gmra.mxu0 %v1899
      %v1940 = vpop.f32.mrf.mxu0
      %v1941 = vadd.f32 %v1918, %v1940
      %1942 = vdwg.mxu0
      %v1943 = vadd.f32 %v1837, %v1938
      %v1944 = vadd.f32 %v1838, %v1941
      %v1945 = vld [vmem:[%s976] sm:$0x1]
      %v1946 = vld [vmem:[%s979] sm:$0x1]
      %1947 = vadd.xlane.f32.xlu0 %v1943
      %v1948 = vpop.xlane.xlu0 %1947
      %1949 = vadd.xlane.f32.xlu0 %v1944
      %v1950 = vpop.xlane.xlu0 %1949
      %v1951 = vmul.f32 %v1948, 0.03125
      %v1952 = vmul.f32 %v1950, 0.03125
      %v1953 = vmul.f32 %v1943, %v1943
      %v1954 = vmul.f32 %v1944, %v1944
      %1955 = vadd.xlane.f32.xlu0 %v1953
      %v1956 = vpop.xlane.xlu0 %1955
      %1957 = vadd.xlane.f32.xlu0 %v1954
      %v1958 = vpop.xlane.xlu0 %1957
      %v1959 = vmul.f32 %v1956, 0.03125
      %v1960 = vmul.f32 %v1958, 0.03125
      %v1961 = vmul.f32 %v1951, %v1951
      %v1962 = vmul.f32 %v1952, %v1952
      %v1963 = vsub.f32 %v1959, %v1961
      %v1964 = vsub.f32 %v1960, %v1962
      %v1965 = vmax.f32 %v1963, 0.0
      %v1966 = vmax.f32 %v1964, 0.0
      %v1967 = vsub.f32 %v1943, %v1951
      %v1968 = vsub.f32 %v1944, %v1952
      %v1969 = vadd.f32 %v1965, 1e-12
      %v1970 = vadd.f32 %v1966, 1e-12
      %v1971 = vrsqrt.pop %v1969
      %v1972 = vmul.f32 %v1971, %v1969
      %v1973 = vmul.f32 %v1972, %v1971
      %v1974 = vmul.f32 0.5, %v1973
      %v1975 = vsub.f32 1.5, %v1974
      %v1976 = vmul.f32 %v1971, %v1975
      %vm1977 = vweird.f32 %v1969
      %vm1978 = vweird.f32 %v1971
      %vm1979 = vmor %vm1977, %vm1978
      %v1980 = vsel %vm1979, %v1971, %v1976
      %v1981 = vrsqrt.pop %v1970
      %v1982 = vmul.f32 %v1981, %v1970
      %v1983 = vmul.f32 %v1982, %v1981
      %v1984 = vmul.f32 0.5, %v1983
      %v1985 = vsub.f32 1.5, %v1984
      %v1986 = vmul.f32 %v1981, %v1985
      %vm1987 = vweird.f32 %v1970
      %vm1988 = vweird.f32 %v1981
      %vm1989 = vmor %vm1987, %vm1988
      %v1990 = vsel %vm1989, %v1981, %v1986
      %v1991 = vmul.f32 %v1967, %v1980
      %v1992 = vmul.f32 %v1968, %v1990
      %v1994 = vperm.slane %v1945, 0
      %v1996 = vmul.f32 %v1991, %v1994
      %v1997 = vmul.f32 %v1992, %v1994
      %v1999 = vperm.slane %v1946, 0
      %v2001 = vadd.f32 %v1996, %v1999
      %v2002 = vadd.f32 %v1997, %v1999
      %2003 = vst [vmem:[#allocation2] sm:$0xff] %v2001
      %2004 = vst [vmem:[#allocation2 + $0x8] sm:$0xff] %v2002
      %p2005 = scmp.eq.s32.totalorder %s38, 1
      // Predicated region
      $region113: #{bert_model_forward.1} parent=107 // pred_check
        %p2006 = pneg %p2005
      $region114: #{bert_model_forward.1} parent=107 // pred_check_branch
        %2008 = sbr.rel (%p2006) target = $region116
      $region115: #{bert_model_forward.1} parent=107 // pred_region
        %v2009 = vld [vmem:[%s20] sm:$0xff]
        %v2010 = vld [vmem:[%s20 + $0x8] sm:$0xff]
        %v2011 = vld [vmem:[%s20 + $0x10] sm:$0xff]
        %v2012 = vld [vmem:[%s20 + $0x18] sm:$0xff]
        %v2013 = vld [vmem:[%s20 + $0x20] sm:$0xff]
        %v2014 = vld [vmem:[%s20 + $0x28] sm:$0xff]
        %v2015 = vld [vmem:[%s20 + $0x30] sm:$0xff]
        %v2016 = vld [vmem:[%s20 + $0x38] sm:$0xff]
        %v2017 = vld [vmem:[%s20 + $0x40] sm:$0xff]
        %v2018 = vld [vmem:[%s20 + $0x48] sm:$0xff]
        %v2019 = vld [vmem:[%s20 + $0x50] sm:$0xff]
        %v2020 = vld [vmem:[%s20 + $0x58] sm:$0xff]
        %v2021 = vld [vmem:[%s20 + $0x60] sm:$0xff]
        %v2022 = vld [vmem:[%s20 + $0x68] sm:$0xff]
        %v2023 = vld [vmem:[%s20 + $0x70] sm:$0xff]
        %v2024 = vld [vmem:[%s20 + $0x78] sm:$0xff]
        %v2025 = vld [vmem:[%s21] sm:$0x1]
        %v2027 = vperm.slane %v2025, 0
        %v2031 = vrot.slane %v2002, 7
        %vm2032 = vcmask 1041409
        %v2033 = vsel %vm2032, %v2031, %v2001
        %2035 = vmatpush.msra.mxu0 %v2024
        %2036 = vmatpush.msra.mxu0 %v2023
        %2037 = vmatpush.msra.mxu0 %v2022
        %2038 = vmatpush.msra.mxu0 %v2021
        %2039 = vmatpush.msra.mxu0 %v2020
        %2040 = vmatpush.msra.mxu0 %v2019
        %2041 = vmatpush.msra.mxu0 %v2018
        %2042 = vmatpush.msra.mxu0 %v2017
        %2043 = vmatpush.msra.mxu0 %v2016
        %2044 = vmatpush.msra.mxu0 %v2015
        %2045 = vmatpush.msra.mxu0 %v2014
        %2046 = vmatpush.msra.mxu0 %v2013
        %2047 = vmatpush.msra.mxu0 %v2012
        %2048 = vmatpush.msra.mxu0 %v2011
        %2049 = vmatpush.msra.mxu0 %v2010
        %2050 = vmatpush.msra.mxu0 %v2009
        %2051 = vmatmul.f32.gmra.mxu0 %v2033
        %v2052 = vpop.f32.mrf.mxu0
        %v2053 = vadd.f32 %v2027, %v2052
        %2054 = vdwg.mxu0
        %2055 = vst [vmem:[%s983] sm:$0x3] %v2053
      $region116: #{bert_model_forward.1} parent=107 // pred_fallthru
        _
      %p2056 = scmp.lt.s32.totalorder %s37, 1
      %s2057 = scalar_select %p2056, %s37, 1
      %s2058 = smul.addr %s2057, 2
      %s2059 = scalar_lea.vmem %s22, %s2058
      // Predicated region
      $region117: #{bert_model_forward.1} parent=107 // pred_check
        %p2060 = pneg %p615
      $region118: #{bert_model_forward.1} parent=107 // pred_check_branch
        %2062 = sbr.rel (%p2060) target = $region120
      $region119: #{bert_model_forward.1} parent=107 // pred_region
        _
      $region120: #{bert_model_forward.1} parent=107 // pred_fallthru
        _
    $region108: #{bert_model_forward.1} parent=5 // pred_fallthru
      _
    %p2063 = scmp.le.s32.totalorder 2, %s28
    // Predicated region
    $region121: #{bert_model_forward.1} parent=5 // pred_check
      %p2064 = pneg %p2063
    $region122: #{bert_model_forward.1} parent=5 // pred_check_branch
      %2066 = sbr.rel (%p2064) target = $region124
    $region123: #{bert_model_forward.1} parent=5 // pred_region
      %s2067 = ssub.s32 %s28, 2
      // Predicated region
      $region125: #{bert_model_forward.1} parent=123 // pred_check
        %p2068 = pneg %p621
      $region126: #{bert_model_forward.1} parent=123 // pred_check_branch
        %2070 = sbr.rel (%p2068) target = $region128
      $region127: #{bert_model_forward.1} parent=123 // pred_region
        %p2071 = scmp.lt.s32.totalorder %s39, 1
        %s2072 = scalar_select %p2071, %s39, 1
        %s2073 = smul.addr %s2072, 2
        %s2074 = scalar_lea.vmem %s22, %s2073
      $region128: #{bert_model_forward.1} parent=123 // pred_fallthru
        _
    $region124: #{bert_model_forward.1} parent=5 // pred_fallthru
      _
  $region6: #{bert_model_forward.1} parent=0 // loop_footer
    %s32 = sadd.s32 1, %s28
  $region7: #{bert_model_forward.1} parent=0 // loop_footer_branch
    %27 = sbr.rel target = $region3
  $region8: #{bert_model_forward.1} parent=0 // loop_exit
    _

</llo_original>
